<compile_context>
chip_gen: v5e
topology: v5e:2x2
jax: 0.10.0
libtpu: 0.0.40
codegen_flags: <defaults>
</compile_context>

<pallas_src>
import math

import jax
import jax.numpy as jnp
from jax.experimental import pallas as pl
from jax.experimental.pallas import tpu as pltpu

# ------------------------- small ChatGLM-style config -------------------------
HIDDEN = 32
NUM_HEADS = 4
HEAD_DIM = HIDDEN // NUM_HEADS          # 8
NUM_KV_HEADS = 2                        # multi_query_group_num (GQA)
GROUP = NUM_HEADS // NUM_KV_HEADS       # 2
Q_SIZE = NUM_HEADS * HEAD_DIM           # 32
KV_SIZE = NUM_KV_HEADS * HEAD_DIM       # 16
FFN = 64                                # ffn_hidden_size
NUM_LAYERS = 2
VOCAB = 128                             # padded_vocab_size
EPS = 1e-5
ROPE_BASE = 10000.0                     # rope_ratio = 1.0
ROTARY_DIM = HEAD_DIM // 2              # partial rotary (4)
SEQ = 8
SCALE = HEAD_DIM ** -0.5

# lane-dense padded widths (vreg lane width = 128)
H_PAD = 128                             # hidden 32 -> 128 (pad lanes stay exactly 0)
QKV_PAD = 128                           # q(32) | k_expanded(32) | v_expanded(32) | pad(32)


# ------------------------------ fused kernel ----------------------------------
def _glm_forward_kernel(ids_ref, emb_ref, cos_ref, sin_ref, swap_ref,
                        ln1_ref, wqkv_ref, bqkv_ref, wdense_ref,
                        ln2_ref, wh4h_ref, w4hh_ref, fln_ref,
                        o_ref, h_ref):
    layer = pl.program_id(0)
    t = h_ref.shape[0]

    # ---- layer 0: fused embedding lookup (one-hot @ table, lane-dense MXU) ----
    @pl.when(layer == 0)
    def _():
        ids = ids_ref[...]                                               # (T, 1) int32
        vocab_iota = jax.lax.broadcasted_iota(jnp.int32, (t, VOCAB), 1)
        onehot = (vocab_iota == ids).astype(jnp.bfloat16)                # (T, VOCAB)
        h_ref[...] = jnp.dot(onehot, emb_ref[...],
                             preferred_element_type=jnp.float32)

    x = h_ref[...]                                                       # (T, H_PAD) residual stream

    def rmsnorm(y, w):
        # pad lanes are zero, so sum/HIDDEN == mean over the true hidden dim.
        var = jnp.sum(y * y, axis=-1, keepdims=True) * (1.0 / HIDDEN)
        return y * jax.lax.rsqrt(var + EPS) * w

    # ---- input RMSNorm + QKV (+bias) + fused partial interleaved RoPE ----
    xn = rmsnorm(x, ln1_ref[0])
    qkv = jnp.dot(xn.astype(jnp.bfloat16), wqkv_ref[0],
                  preferred_element_type=jnp.float32) + bqkv_ref[0]       # (T, QKV_PAD)
    swapped = jnp.dot(qkv, swap_ref[...], preferred_element_type=jnp.float32)
    qkv = qkv * cos_ref[...] + swapped * sin_ref[...]                     # rotates q,k lanes only

    # ---- causal GQA attention, batched over heads (kv already expanded) ----
    q = qkv[:, 0:Q_SIZE]
    k = qkv[:, Q_SIZE:2 * Q_SIZE]
    v = qkv[:, 2 * Q_SIZE:3 * Q_SIZE]
    q3 = jnp.stack([q[:, h * HEAD_DIM:(h + 1) * HEAD_DIM] for h in range(NUM_HEADS)], axis=0)
    k3 = jnp.stack([k[:, h * HEAD_DIM:(h + 1) * HEAD_DIM] for h in range(NUM_HEADS)], axis=0)
    v3 = jnp.stack([v[:, h * HEAD_DIM:(h + 1) * HEAD_DIM] for h in range(NUM_HEADS)], axis=0)
    s = jnp.einsum('hqd,hkd->hqk', q3, k3, preferred_element_type=jnp.float32) * SCALE
    row = jax.lax.broadcasted_iota(jnp.int32, (NUM_HEADS, t, t), 1)
    col = jax.lax.broadcasted_iota(jnp.int32, (NUM_HEADS, t, t), 2)
    s = jnp.where(col <= row, s, -jnp.inf)                                # diagonal always kept
    s = s - jnp.max(s, axis=-1, keepdims=True)
    p = jnp.exp(s)
    p = p / jnp.sum(p, axis=-1, keepdims=True)
    ctx3 = jnp.einsum('hqk,hkd->hqd', p, v3, preferred_element_type=jnp.float32)
    ctx = jnp.concatenate([ctx3[h] for h in range(NUM_HEADS)], axis=-1)   # (T, Q_SIZE)

    # ---- dense + residual (epilogue fusion; ctx never hits a store) ----
    x = x + jnp.dot(ctx.astype(jnp.bfloat16), wdense_ref[0],
                    preferred_element_type=jnp.float32)

    # ---- post-attention RMSNorm + SwiGLU MLP + residual ----
    xn2 = rmsnorm(x, ln2_ref[0])
    h4 = jnp.dot(xn2.astype(jnp.bfloat16), wh4h_ref[0],
                 preferred_element_type=jnp.float32)                      # (T, 2*FFN) merged gate|up
    gate = h4[:, :FFN]
    up = h4[:, FFN:]
    act = gate * jax.nn.sigmoid(gate) * up
    x = x + jnp.dot(act.astype(jnp.bfloat16), w4hh_ref[0],
                    preferred_element_type=jnp.float32)

    h_ref[...] = x                                                        # carry to next layer

    # ---- final RMSNorm (post_layer_norm=True) on the last layer only ----
    @pl.when(layer == NUM_LAYERS - 1)
    def _():
        o_ref[...] = rmsnorm(x, fln_ref[...]).astype(o_ref.dtype)


# ---------------------------- wrapper / prep ----------------------------------
def build_rope_tables(positions):
    """Full-width (T, QKV_PAD) cos / signed-sin tables for GPT-J interleaved partial RoPE."""
    t = positions.shape[0]
    inv_freq = 1.0 / (ROPE_BASE ** (jnp.arange(0, ROTARY_DIM, 2, dtype=jnp.float32) / ROTARY_DIM))
    freqs = positions.astype(jnp.float32)[:, None] * inv_freq[None, :]    # (T, ROTARY_DIM//2)
    cos = jnp.cos(freqs)
    sin = jnp.sin(freqs)
    ones_pass = jnp.ones((t, HEAD_DIM - ROTARY_DIM), jnp.float32)
    zeros_pass = jnp.zeros((t, HEAD_DIM - ROTARY_DIM), jnp.float32)
    # per-head lane patterns: cos = [c0,c0,c1,c1,1,1,1,1], sin = [-s0,+s0,-s1,+s1,0,0,0,0]
    cos_head = jnp.concatenate([jnp.repeat(cos, 2, axis=1), ones_pass], axis=1)
    sin_head = jnp.concatenate(
        [jnp.stack([-sin, sin], axis=-1).reshape(t, ROTARY_DIM), zeros_pass], axis=1)
    cos_qk = jnp.tile(cos_head, (1, NUM_HEADS))                           # (T, Q_SIZE)
    sin_qk = jnp.tile(sin_head, (1, NUM_HEADS))
    rest = QKV_PAD - 2 * Q_SIZE                                           # v lanes + pad -> identity
    cos_full = jnp.concatenate([cos_qk, cos_qk, jnp.ones((t, rest), jnp.float32)], axis=1)
    sin_full = jnp.concatenate([sin_qk, sin_qk, jnp.zeros((t, rest), jnp.float32)], axis=1)
    return cos_full, sin_full


def chatglm_forward(input_ids, positions, prepped):
    # TODO(synk): paged kv_caches / attn_metadata not modeled (single-sequence prefill causal
    # attention only); vision tower / multimodal merge not modeled.
    # TODO(synk): at real ChatGLM sizes add token/K grid tiling (bf16 weight tiles, per-gen
    # VMEM budget, 'parallel' token axis for v7x dual-TC) instead of whole-array VMEM blocks.
    t = input_ids.shape[0]
    ids = input_ids.reshape(t, 1).astype(jnp.int32)
    rope_cos, rope_sin = build_rope_tables(positions)

    operands = (ids, prepped["embedding"], rope_cos, rope_sin, prepped["swap"],
                prepped["ln1"], prepped["wqkv"], prepped["bqkv"], prepped["wdense"],
                prepped["ln2"], prepped["wh4h"], prepped["w4hh"], prepped["final_ln"])

    mm = lambda m, kk, n: 2 * m * kk * n
    per_layer = (mm(t, H_PAD, QKV_PAD) + mm(t, QKV_PAD, QKV_PAD)
                 + 2 * NUM_HEADS * mm(t, HEAD_DIM, t)
                 + mm(t, Q_SIZE, H_PAD) + mm(t, H_PAD, 2 * FFN) + mm(t, FFN, H_PAD))
    cost = pl.CostEstimate(
        flops=NUM_LAYERS * per_layer + mm(t, VOCAB, H_PAD),
        transcendentals=NUM_LAYERS * (NUM_HEADS * t * t + t * FFN),
        bytes_accessed=sum(math.prod(a.shape) * a.dtype.itemsize for a in operands)
        + t * H_PAD * 4)

    grid_spec = pltpu.PrefetchScalarGridSpec(
        num_scalar_prefetch=0,
        grid=(NUM_LAYERS,),
        in_specs=[
            pl.BlockSpec((t, 1), lambda l: (0, 0)),                   # input ids
            pl.BlockSpec((VOCAB, H_PAD), lambda l: (0, 0)),           # embedding table
            pl.BlockSpec((t, QKV_PAD), lambda l: (0, 0)),             # rope cos
            pl.BlockSpec((t, QKV_PAD), lambda l: (0, 0)),             # rope signed sin
            pl.BlockSpec((QKV_PAD, QKV_PAD), lambda l: (0, 0)),       # pair-swap permutation
            pl.BlockSpec((1, 1, H_PAD), lambda l: (l, 0, 0)),         # input_layernorm w
            pl.BlockSpec((1, H_PAD, QKV_PAD), lambda l: (l, 0, 0)),   # qkv weight
            pl.BlockSpec((1, 1, QKV_PAD), lambda l: (l, 0, 0)),       # qkv bias
            pl.BlockSpec((1, Q_SIZE, H_PAD), lambda l: (l, 0, 0)),    # dense weight
            pl.BlockSpec((1, 1, H_PAD), lambda l: (l, 0, 0)),         # post_attention_layernorm w
            pl.BlockSpec((1, H_PAD, 2 * FFN), lambda l: (l, 0, 0)),   # h_to_4h weight
            pl.BlockSpec((1, FFN, H_PAD), lambda l: (l, 0, 0)),       # 4h_to_h weight
            pl.BlockSpec((1, H_PAD), lambda l: (0, 0)),               # final layernorm w
        ],
        out_specs=pl.BlockSpec((t, H_PAD), lambda l: (0, 0)),
        scratch_shapes=[pltpu.VMEM((t, H_PAD), jnp.float32)],         # residual-stream carry
    )

    out = pl.pallas_call(
        _glm_forward_kernel,
        out_shape=jax.ShapeDtypeStruct((t, H_PAD), jnp.float32),
        grid_spec=grid_spec,
        compiler_params=pltpu.CompilerParams(
            dimension_semantics=("arbitrary",)),   # layer axis carries state -> sequential
        cost_estimate=cost,
    )(*operands)
    return out[:, :HIDDEN]


# ------------------------------ param init / prep ------------------------------
def init_params(key):
    def norm(k, shape, scale=0.02):
        return (scale * jax.random.normal(k, shape)).astype(jnp.float32)

    keys = jax.random.split(key, 2 + NUM_LAYERS)
    params = {
        "embedding": norm(keys[0], (VOCAB, HIDDEN), 0.05),
        "final_ln": jnp.ones((HIDDEN,), jnp.float32) + norm(keys[1], (HIDDEN,), 0.01),
        "layers": [],
    }
    for i in range(NUM_LAYERS):
        lk = jax.random.split(keys[2 + i], 8)
        params["layers"].append({
            "input_ln": jnp.ones((HIDDEN,), jnp.float32) + norm(lk[0], (HIDDEN,), 0.01),
            "qkv_w": norm(lk[1], (HIDDEN, Q_SIZE + 2 * KV_SIZE)),
            "qkv_b": norm(lk[2], (Q_SIZE + 2 * KV_SIZE,)),
            "dense_w": norm(lk[3], (Q_SIZE, HIDDEN)),
            "post_ln": jnp.ones((HIDDEN,), jnp.float32) + norm(lk[4], (HIDDEN,), 0.01),
            "h_to_4h_w": norm(lk[5], (HIDDEN, 2 * FFN)),
            "fourh_to_h_w": norm(lk[6], (FFN, HIDDEN)),
        })
    return params


def _pad2d(w, rows, cols):
    out = jnp.zeros((rows, cols), w.dtype)
    return out.at[:w.shape[0], :w.shape[1]].set(w)


def _expand_kv_cols(w):
    """Replicate each KV head GROUP times along the head axis (GQA -> MHA weights)."""
    r = w.shape[0]
    w = w.reshape(r, NUM_KV_HEADS, HEAD_DIM)
    w = jnp.repeat(w, GROUP, axis=1)
    return w.reshape(r, NUM_HEADS * HEAD_DIM)


def prepare_params(params):
    """One-time weight repack: lane-pad to 128, expand GQA KV, stack per-layer, bf16 matmul weights."""
    out = {
        "embedding": _pad2d(params["embedding"], VOCAB, H_PAD).astype(jnp.bfloat16),
        "final_ln": _pad2d(params["final_ln"].reshape(1, -1), 1, H_PAD),
    }
    perm = jnp.arange(QKV_PAD) ^ 1                            # even/odd pair swap (symmetric)
    out["swap"] = jnp.eye(QKV_PAD, dtype=jnp.float32)[perm]

    ln1, wqkv, bqkv, wdense, ln2, wh4h, w4hh = [], [], [], [], [], [], []
    for p in params["layers"]:
        ln1.append(_pad2d(p["input_ln"].reshape(1, -1), 1, H_PAD))
        wq = p["qkv_w"][:, :Q_SIZE]
        wk = _expand_kv_cols(p["qkv_w"][:, Q_SIZE:Q_SIZE + KV_SIZE])
        wv = _expand_kv_cols(p["qkv_w"][:, Q_SIZE + KV_SIZE:])
        wqkv.append(_pad2d(jnp.concatenate([wq, wk, wv], axis=1), H_PAD, QKV_PAD))
        bq = p["qkv_b"][:Q_SIZE]
        bk = _expand_kv_cols(p["qkv_b"][Q_SIZE:Q_SIZE + KV_SIZE].reshape(1, -1))[0]
        bv = _expand_kv_cols(p["qkv_b"][Q_SIZE + KV_SIZE:].reshape(1, -1))[0]
        bqkv.append(_pad2d(jnp.concatenate([bq, bk, bv]).reshape(1, -1), 1, QKV_PAD))
        wdense.append(_pad2d(p["dense_w"], Q_SIZE, H_PAD))
        ln2.append(_pad2d(p["post_ln"].reshape(1, -1), 1, H_PAD))
        wh4h.append(_pad2d(p["h_to_4h_w"], H_PAD, 2 * FFN))
        w4hh.append(_pad2d(p["fourh_to_h_w"], FFN, H_PAD))

    out["ln1"] = jnp.stack(ln1)
    out["wqkv"] = jnp.stack(wqkv).astype(jnp.bfloat16)
    out["bqkv"] = jnp.stack(bqkv)
    out["wdense"] = jnp.stack(wdense).astype(jnp.bfloat16)
    out["ln2"] = jnp.stack(ln2)
    out["wh4h"] = jnp.stack(wh4h).astype(jnp.bfloat16)
    out["w4hh"] = jnp.stack(w4hh).astype(jnp.bfloat16)
    return out


if __name__ == "__main__":
    key = jax.random.PRNGKey(0)
    k_params, k_ids = jax.random.split(key)
    params = init_params(k_params)
    prepped = prepare_params(params)           # one-time lane-pad / GQA-expand / stack

    input_ids = jax.random.randint(k_ids, (SEQ,), 0, VOCAB, dtype=jnp.int32)
    positions = jnp.arange(SEQ, dtype=jnp.int32)

    fwd = jax.jit(chatglm_forward)
    out = fwd(input_ids, positions, prepped)
    jax.block_until_ready(out)

    assert out.shape == (SEQ, HIDDEN), out.shape
    assert out.dtype == jnp.float32
    assert not bool(jnp.any(jnp.isnan(out)))
    print("KERNEL_OK")
</pallas_src>

<mosaic_0001>
module attributes {stable_mosaic.version = 11 : i64} {
  func.func @_glm_forward_kernel(%arg0: i32, %arg1: memref<8x1xi32, #tpu.memory_space<vmem>>, %arg2: memref<128x128xbf16, #tpu.memory_space<vmem>>, %arg3: memref<8x128xf32, #tpu.memory_space<vmem>>, %arg4: memref<8x128xf32, #tpu.memory_space<vmem>>, %arg5: memref<128x128xf32, #tpu.memory_space<vmem>>, %arg6: memref<1x1x128xf32, #tpu.memory_space<vmem>>, %arg7: memref<1x128x128xbf16, #tpu.memory_space<vmem>>, %arg8: memref<1x1x128xf32, #tpu.memory_space<vmem>>, %arg9: memref<1x32x128xbf16, #tpu.memory_space<vmem>>, %arg10: memref<1x1x128xf32, #tpu.memory_space<vmem>>, %arg11: memref<1x128x128xbf16, #tpu.memory_space<vmem>>, %arg12: memref<1x64x128xbf16, #tpu.memory_space<vmem>>, %arg13: memref<1x128xf32, #tpu.memory_space<vmem>>, %arg14: memref<8x128xf32, #tpu.memory_space<vmem>>, %arg15: memref<8x128xf32, #tpu.memory_space<vmem>>) attributes {dimension_semantics = [#tpu.dimension_semantics<arbitrary>], iteration_bounds = array<i64: 2>, scalar_prefetch = 0 : i64, scratch_operands = 1 : i64, tpu.core_type = #tpu.core_type<tc>, window_params = [{pipeline_mode = #tpu.pipeline_mode<synchronous>, transform_indices = @transform_0, window_bounds = array<i64: 8, 1>}, {pipeline_mode = #tpu.pipeline_mode<synchronous>, transform_indices = @transform_1, window_bounds = array<i64: 128, 128>}, {pipeline_mode = #tpu.pipeline_mode<synchronous>, transform_indices = @transform_2, window_bounds = array<i64: 8, 128>}, {pipeline_mode = #tpu.pipeline_mode<synchronous>, transform_indices = @transform_3, window_bounds = array<i64: 8, 128>}, {pipeline_mode = #tpu.pipeline_mode<synchronous>, transform_indices = @transform_4, window_bounds = array<i64: 128, 128>}, {transform_indices = @transform_5, window_bounds = array<i64: 1, 1, 128>}, {transform_indices = @transform_6, window_bounds = array<i64: 1, 128, 128>}, {transform_indices = @transform_7, window_bounds = array<i64: 1, 1, 128>}, {transform_indices = @transform_8, window_bounds = array<i64: 1, 32, 128>}, {transform_indices = @transform_9, window_bounds = array<i64: 1, 1, 128>}, {transform_indices = @transform_10, window_bounds = array<i64: 1, 128, 128>}, {transform_indices = @transform_11, window_bounds = array<i64: 1, 64, 128>}, {pipeline_mode = #tpu.pipeline_mode<synchronous>, transform_indices = @transform_12, window_bounds = array<i64: 1, 128>}, {pipeline_mode = #tpu.pipeline_mode<synchronous>, transform_indices = @transform_13, window_bounds = array<i64: 8, 128>}]} {
    %c0_i32 = arith.constant 0 : i32
    %0 = arith.cmpi eq, %arg0, %c0_i32 : i32
    %1 = arith.extui %0 : i1 to i32
    %c0_i32_0 = arith.constant 0 : i32
    %2 = arith.cmpi ne, %1, %c0_i32_0 : i32
    scf.if %2 {
      %c0_49 = arith.constant 0 : index
      %c0_50 = arith.constant 0 : index
      %131 = vector.load %arg1[%c0_49, %c0_50] : memref<8x1xi32, #tpu.memory_space<vmem>>, vector<8x1xi32>
      %132 = tpu.iota {dimensions = array<i32: 1>} : vector<8x128xi32>
      %133 = vector.broadcast %131 : vector<8x1xi32> to vector<8x128xi32>
      %134 = arith.cmpi eq, %132, %133 : vector<8x128xi32>
      %135 = arith.extui %134 : vector<8x128xi1> to vector<8x128xi32>
      %136 = arith.sitofp %135 : vector<8x128xi32> to vector<8x128xf32>
      %137 = arith.truncf %136 : vector<8x128xf32> to vector<8x128xbf16>
      %c0_51 = arith.constant 0 : index
      %c0_52 = arith.constant 0 : index
      %138 = vector.load %arg2[%c0_51, %c0_52] : memref<128x128xbf16, #tpu.memory_space<vmem>>, vector<128x128xbf16>
      %cst_53 = arith.constant dense<0.000000e+00> : vector<8x128xf32>
      %139 = tpu.matmul %137, %138, %cst_53 {dimension_numbers = #tpu.dot_dimension_numbers<[1], [0], [0], [1], [0, 0, 1, 1], [], []>} : vector<8x128xbf16>, vector<128x128xbf16>, vector<8x128xf32> -> vector<8x128xf32>
      %c0_54 = arith.constant 0 : index
      %c0_55 = arith.constant 0 : index
      %140 = vector.load %arg15[%c0_54, %c0_55] : memref<8x128xf32, #tpu.memory_space<vmem>>, vector<8x128xf32>
      tpu.vector_store %arg15[%c0_54, %c0_55], %139 {strides = array<i32>} : memref<8x128xf32, #tpu.memory_space<vmem>>, vector<8x128xf32>,
    } else {
    }
    %c0 = arith.constant 0 : index
    %c0_1 = arith.constant 0 : index
    %3 = vector.load %arg15[%c0, %c0_1] : memref<8x128xf32, #tpu.memory_space<vmem>>, vector<8x128xf32>
    %c0_2 = arith.constant 0 : index
    %c0_3 = arith.constant 0 : index
    %c0_4 = arith.constant 0 : index
    %4 = vector.load %arg6[%c0_2, %c0_3, %c0_4] : memref<1x1x128xf32, #tpu.memory_space<vmem>>, vector<1x1x128xf32>
    %5 = vector.shape_cast %4 : vector<1x1x128xf32> to vector<1x128xf32>
    %6 = arith.mulf %3, %3 : vector<8x128xf32>
    %cst = arith.constant dense<0.000000e+00> : vector<8xf32>
    %7 = vector.multi_reduction <add>, %6, %cst [1] : vector<8x128xf32> to vector<8xf32>
    %8 = vector.shape_cast %7 : vector<8xf32> to vector<8x1xf32>
    %cst_5 = arith.constant 3.125000e-02 : f32
    %9 = vector.broadcast %cst_5 : f32 to vector<8x1xf32>
    %10 = arith.mulf %8, %9 : vector<8x1xf32>
    %cst_6 = arith.constant 9.99999974E-6 : f32
    %11 = vector.broadcast %cst_6 : f32 to vector<8x1xf32>
    %12 = arith.addf %10, %11 : vector<8x1xf32>
    %13 = math.rsqrt %12 : vector<8x1xf32>
    %14 = vector.broadcast %13 : vector<8x1xf32> to vector<8x128xf32>
    %15 = arith.mulf %3, %14 : vector<8x128xf32>
    %16 = vector.broadcast %5 : vector<1x128xf32> to vector<8x128xf32>
    %17 = arith.mulf %15, %16 : vector<8x128xf32>
    %18 = arith.truncf %17 : vector<8x128xf32> to vector<8x128xbf16>
    %c0_7 = arith.constant 0 : index
    %c0_8 = arith.constant 0 : index
    %c0_9 = arith.constant 0 : index
    %19 = vector.load %arg7[%c0_7, %c0_8, %c0_9] : memref<1x128x128xbf16, #tpu.memory_space<vmem>>, vector<1x128x128xbf16>
    %20 = vector.shape_cast %19 : vector<1x128x128xbf16> to vector<128x128xbf16>
    %cst_10 = arith.constant dense<0.000000e+00> : vector<8x128xf32>
    %21 = tpu.matmul %18, %20, %cst_10 {dimension_numbers = #tpu.dot_dimension_numbers<[1], [0], [0], [1], [0, 0, 1, 1], [], []>} : vector<8x128xbf16>, vector<128x128xbf16>, vector<8x128xf32> -> vector<8x128xf32>
    %c0_11 = arith.constant 0 : index
    %c0_12 = arith.constant 0 : index
    %c0_13 = arith.constant 0 : index
    %22 = vector.load %arg8[%c0_11, %c0_12, %c0_13] : memref<1x1x128xf32, #tpu.memory_space<vmem>>, vector<1x1x128xf32>
    %23 = vector.shape_cast %22 : vector<1x1x128xf32> to vector<1x128xf32>
    %24 = vector.broadcast %23 : vector<1x128xf32> to vector<8x128xf32>
    %25 = arith.addf %21, %24 : vector<8x128xf32>
    %c0_14 = arith.constant 0 : index
    %c0_15 = arith.constant 0 : index
    %26 = vector.load %arg5[%c0_14, %c0_15] : memref<128x128xf32, #tpu.memory_space<vmem>>, vector<128x128xf32>
    %cst_16 = arith.constant dense<0.000000e+00> : vector<8x128xf32>
    %27 = tpu.matmul %25, %26, %cst_16 {dimension_numbers = #tpu.dot_dimension_numbers<[1], [0], [0], [1], [0, 0, 1, 1], [], []>} : vector<8x128xf32>, vector<128x128xf32>, vector<8x128xf32> -> vector<8x128xf32>
    %c0_17 = arith.constant 0 : index
    %c0_18 = arith.constant 0 : index
    %28 = vector.load %arg3[%c0_17, %c0_18] : memref<8x128xf32, #tpu.memory_space<vmem>>, vector<8x128xf32>
    %29 = arith.mulf %25, %28 : vector<8x128xf32>
    %c0_19 = arith.constant 0 : index
    %c0_20 = arith.constant 0 : index
    %30 = vector.load %arg4[%c0_19, %c0_20] : memref<8x128xf32, #tpu.memory_space<vmem>>, vector<8x128xf32>
    %31 = arith.mulf %27, %30 : vector<8x128xf32>
    %32 = arith.addf %29, %31 : vector<8x128xf32>
    %33 = vector.extract_strided_slice %32 {offsets = [0, 0], sizes = [8, 32], strides = [1, 1]} : vector<8x128xf32> to vector<8x32xf32>
    %34 = vector.extract_strided_slice %32 {offsets = [0, 32], sizes = [8, 32], strides = [1, 1]} : vector<8x128xf32> to vector<8x32xf32>
    %35 = vector.extract_strided_slice %32 {offsets = [0, 64], sizes = [8, 32], strides = [1, 1]} : vector<8x128xf32> to vector<8x32xf32>
    %36 = vector.extract_strided_slice %33 {offsets = [0, 0], sizes = [8, 8], strides = [1, 1]} : vector<8x32xf32> to vector<8x8xf32>
    %37 = vector.extract_strided_slice %33 {offsets = [0, 8], sizes = [8, 8], strides = [1, 1]} : vector<8x32xf32> to vector<8x8xf32>
    %38 = vector.extract_strided_slice %33 {offsets = [0, 16], sizes = [8, 8], strides = [1, 1]} : vector<8x32xf32> to vector<8x8xf32>
    %39 = vector.extract_strided_slice %33 {offsets = [0, 24], sizes = [8, 8], strides = [1, 1]} : vector<8x32xf32> to vector<8x8xf32>
    %40 = vector.shape_cast %36 : vector<8x8xf32> to vector<1x8x8xf32>
    %41 = vector.shape_cast %37 : vector<8x8xf32> to vector<1x8x8xf32>
    %42 = vector.shape_cast %38 : vector<8x8xf32> to vector<1x8x8xf32>
    %43 = vector.shape_cast %39 : vector<8x8xf32> to vector<1x8x8xf32>
    %44 = tpu.concatenate %40, %41, %42, %43 in 0 : vector<1x8x8xf32>, vector<1x8x8xf32>, vector<1x8x8xf32>, vector<1x8x8xf32> -> vector<4x8x8xf32>
    %45 = vector.extract_strided_slice %34 {offsets = [0, 0], sizes = [8, 8], strides = [1, 1]} : vector<8x32xf32> to vector<8x8xf32>
    %46 = vector.extract_strided_slice %34 {offsets = [0, 8], sizes = [8, 8], strides = [1, 1]} : vector<8x32xf32> to vector<8x8xf32>
    %47 = vector.extract_strided_slice %34 {offsets = [0, 16], sizes = [8, 8], strides = [1, 1]} : vector<8x32xf32> to vector<8x8xf32>
    %48 = vector.extract_strided_slice %34 {offsets = [0, 24], sizes = [8, 8], strides = [1, 1]} : vector<8x32xf32> to vector<8x8xf32>
    %49 = vector.shape_cast %45 : vector<8x8xf32> to vector<1x8x8xf32>
    %50 = vector.shape_cast %46 : vector<8x8xf32> to vector<1x8x8xf32>
    %51 = vector.shape_cast %47 : vector<8x8xf32> to vector<1x8x8xf32>
    %52 = vector.shape_cast %48 : vector<8x8xf32> to vector<1x8x8xf32>
    %53 = tpu.concatenate %49, %50, %51, %52 in 0 : vector<1x8x8xf32>, vector<1x8x8xf32>, vector<1x8x8xf32>, vector<1x8x8xf32> -> vector<4x8x8xf32>
    %54 = vector.extract_strided_slice %35 {offsets = [0, 0], sizes = [8, 8], strides = [1, 1]} : vector<8x32xf32> to vector<8x8xf32>
    %55 = vector.extract_strided_slice %35 {offsets = [0, 8], sizes = [8, 8], strides = [1, 1]} : vector<8x32xf32> to vector<8x8xf32>
    %56 = vector.extract_strided_slice %35 {offsets = [0, 16], sizes = [8, 8], strides = [1, 1]} : vector<8x32xf32> to vector<8x8xf32>
    %57 = vector.extract_strided_slice %35 {offsets = [0, 24], sizes = [8, 8], strides = [1, 1]} : vector<8x32xf32> to vector<8x8xf32>
    %58 = vector.shape_cast %54 : vector<8x8xf32> to vector<1x8x8xf32>
    %59 = vector.shape_cast %55 : vector<8x8xf32> to vector<1x8x8xf32>
    %60 = vector.shape_cast %56 : vector<8x8xf32> to vector<1x8x8xf32>
    %61 = vector.shape_cast %57 : vector<8x8xf32> to vector<1x8x8xf32>
    %62 = tpu.concatenate %58, %59, %60, %61 in 0 : vector<1x8x8xf32>, vector<1x8x8xf32>, vector<1x8x8xf32>, vector<1x8x8xf32> -> vector<4x8x8xf32>
    "tpu.trace_start"() <{level = 10 : i32, message = "hqd,hkd->hqk"}> : () -> ()
    %cst_21 = arith.constant dense<0.000000e+00> : vector<4x8x8xf32>
    %63 = tpu.matmul %44, %53, %cst_21 {dimension_numbers = #tpu.dot_dimension_numbers<[2], [2], [1], [1], [0, 0, 0, 1, 1, 1], [0], [0]>} : vector<4x8x8xf32>, vector<4x8x8xf32>, vector<4x8x8xf32> -> vector<4x8x8xf32>
    "tpu.trace_stop"() : () -> ()
    %cst_22 = arith.constant 0.353553385 : f32
    %64 = vector.broadcast %cst_22 : f32 to vector<4x8x8xf32>
    %65 = arith.mulf %63, %64 : vector<4x8x8xf32>
    %66 = tpu.iota {dimensions = array<i32: 1>} : vector<4x8x8xi32>
    %67 = tpu.iota {dimensions = array<i32: 2>} : vector<4x8x8xi32>
    %68 = arith.cmpi sle, %67, %66 : vector<4x8x8xi32>
    %cst_23 = arith.constant 0xFF800000 : f32
    %69 = vector.broadcast %cst_23 : f32 to vector<4x8x8xf32>
    %70 = arith.select %68, %65, %69 : vector<4x8x8xi1>, vector<4x8x8xf32>
    %cst_24 = arith.constant dense<0xFF800000> : vector<4x8xf32>
    %71 = vector.multi_reduction <maximumf>, %70, %cst_24 [2] : vector<4x8x8xf32> to vector<4x8xf32>
    %72 = vector.shape_cast %71 : vector<4x8xf32> to vector<4x8x1xf32>
    %73 = vector.broadcast %72 : vector<4x8x1xf32> to vector<4x8x8xf32>
    %74 = arith.subf %70, %73 : vector<4x8x8xf32>
    %75 = math.exp %74 : vector<4x8x8xf32>
    %cst_25 = arith.constant dense<0.000000e+00> : vector<4x8xf32>
    %76 = vector.multi_reduction <add>, %75, %cst_25 [2] : vector<4x8x8xf32> to vector<4x8xf32>
    %77 = vector.shape_cast %76 : vector<4x8xf32> to vector<4x8x1xf32>
    %78 = vector.broadcast %77 : vector<4x8x1xf32> to vector<4x8x8xf32>
    %79 = arith.divf %75, %78 : vector<4x8x8xf32>
    "tpu.trace_start"() <{level = 10 : i32, message = "hqk,hkd->hqd"}> : () -> ()
    %cst_26 = arith.constant dense<0.000000e+00> : vector<4x8x8xf32>
    %80 = tpu.matmul %79, %62, %cst_26 {dimension_numbers = #tpu.dot_dimension_numbers<[2], [1], [1], [2], [0, 0, 0, 1, 1, 2], [0], [0]>} : vector<4x8x8xf32>, vector<4x8x8xf32>, vector<4x8x8xf32> -> vector<4x8x8xf32>
    "tpu.trace_stop"() : () -> ()
    %81 = vector.extract_strided_slice %80 {offsets = [0, 0, 0], sizes = [1, 8, 8], strides = [1, 1, 1]} : vector<4x8x8xf32> to vector<1x8x8xf32>
    %82 = vector.shape_cast %81 : vector<1x8x8xf32> to vector<8x8xf32>
    %83 = vector.extract_strided_slice %80 {offsets = [1, 0, 0], sizes = [1, 8, 8], strides = [1, 1, 1]} : vector<4x8x8xf32> to vector<1x8x8xf32>
    %84 = vector.shape_cast %83 : vector<1x8x8xf32> to vector<8x8xf32>
    %85 = vector.extract_strided_slice %80 {offsets = [2, 0, 0], sizes = [1, 8, 8], strides = [1, 1, 1]} : vector<4x8x8xf32> to vector<1x8x8xf32>
    %86 = vector.shape_cast %85 : vector<1x8x8xf32> to vector<8x8xf32>
    %87 = vector.extract_strided_slice %80 {offsets = [3, 0, 0], sizes = [1, 8, 8], strides = [1, 1, 1]} : vector<4x8x8xf32> to vector<1x8x8xf32>
    %88 = vector.shape_cast %87 : vector<1x8x8xf32> to vector<8x8xf32>
    %89 = tpu.concatenate %82, %84, %86, %88 in 1 : vector<8x8xf32>, vector<8x8xf32>, vector<8x8xf32>, vector<8x8xf32> -> vector<8x32xf32>
    %90 = arith.truncf %89 : vector<8x32xf32> to vector<8x32xbf16>
    %c0_27 = arith.constant 0 : index
    %c0_28 = arith.constant 0 : index
    %c0_29 = arith.constant 0 : index
    %91 = vector.load %arg9[%c0_27, %c0_28, %c0_29] : memref<1x32x128xbf16, #tpu.memory_space<vmem>>, vector<1x32x128xbf16>
    %92 = vector.shape_cast %91 : vector<1x32x128xbf16> to vector<32x128xbf16>
    %cst_30 = arith.constant dense<0.000000e+00> : vector<8x128xf32>
    %93 = tpu.matmul %90, %92, %cst_30 {dimension_numbers = #tpu.dot_dimension_numbers<[1], [0], [0], [1], [0, 0, 1, 1], [], []>} : vector<8x32xbf16>, vector<32x128xbf16>, vector<8x128xf32> -> vector<8x128xf32>
    %94 = arith.addf %3, %93 : vector<8x128xf32>
    %c0_31 = arith.constant 0 : index
    %c0_32 = arith.constant 0 : index
    %c0_33 = arith.constant 0 : index
    %95 = vector.load %arg10[%c0_31, %c0_32, %c0_33] : memref<1x1x128xf32, #tpu.memory_space<vmem>>, vector<1x1x128xf32>
    %96 = vector.shape_cast %95 : vector<1x1x128xf32> to vector<1x128xf32>
    %97 = arith.mulf %94, %94 : vector<8x128xf32>
    %cst_34 = arith.constant dense<0.000000e+00> : vector<8xf32>
    %98 = vector.multi_reduction <add>, %97, %cst_34 [1] : vector<8x128xf32> to vector<8xf32>
    %99 = vector.shape_cast %98 : vector<8xf32> to vector<8x1xf32>
    %cst_35 = arith.constant 3.125000e-02 : f32
    %100 = vector.broadcast %cst_35 : f32 to vector<8x1xf32>
    %101 = arith.mulf %99, %100 : vector<8x1xf32>
    %cst_36 = arith.constant 9.99999974E-6 : f32
    %102 = vector.broadcast %cst_36 : f32 to vector<8x1xf32>
    %103 = arith.addf %101, %102 : vector<8x1xf32>
    %104 = math.rsqrt %103 : vector<8x1xf32>
    %105 = vector.broadcast %104 : vector<8x1xf32> to vector<8x128xf32>
    %106 = arith.mulf %94, %105 : vector<8x128xf32>
    %107 = vector.broadcast %96 : vector<1x128xf32> to vector<8x128xf32>
    %108 = arith.mulf %106, %107 : vector<8x128xf32>
    %109 = arith.truncf %108 : vector<8x128xf32> to vector<8x128xbf16>
    %c0_37 = arith.constant 0 : index
    %c0_38 = arith.constant 0 : index
    %c0_39 = arith.constant 0 : index
    %110 = vector.load %arg11[%c0_37, %c0_38, %c0_39] : memref<1x128x128xbf16, #tpu.memory_space<vmem>>, vector<1x128x128xbf16>
    %111 = vector.shape_cast %110 : vector<1x128x128xbf16> to vector<128x128xbf16>
    %cst_40 = arith.constant dense<0.000000e+00> : vector<8x128xf32>
    %112 = tpu.matmul %109, %111, %cst_40 {dimension_numbers = #tpu.dot_dimension_numbers<[1], [0], [0], [1], [0, 0, 1, 1], [], []>} : vector<8x128xbf16>, vector<128x128xbf16>, vector<8x128xf32> -> vector<8x128xf32>
    %113 = vector.extract_strided_slice %112 {offsets = [0, 0], sizes = [8, 64], strides = [1, 1]} : vector<8x128xf32> to vector<8x64xf32>
    %114 = vector.extract_strided_slice %112 {offsets = [0, 64], sizes = [8, 64], strides = [1, 1]} : vector<8x128xf32> to vector<8x64xf32>
    %115 = arith.negf %113 : vector<8x64xf32>
    %116 = math.exp %115 : vector<8x64xf32>
    %cst_41 = arith.constant 1.000000e+00 : f32
    %117 = vector.broadcast %cst_41 : f32 to vector<8x64xf32>
    %118 = arith.addf %117, %116 : vector<8x64xf32>
    %119 = arith.divf %117, %118 : vector<8x64xf32>
    %120 = arith.mulf %113, %119 : vector<8x64xf32>
    %121 = arith.mulf %120, %114 : vector<8x64xf32>
    %122 = arith.truncf %121 : vector<8x64xf32> to vector<8x64xbf16>
    %c0_42 = arith.constant 0 : index
    %c0_43 = arith.constant 0 : index
    %c0_44 = arith.constant 0 : index
    %123 = vector.load %arg12[%c0_42, %c0_43, %c0_44] : memref<1x64x128xbf16, #tpu.memory_space<vmem>>, vector<1x64x128xbf16>
    %124 = vector.shape_cast %123 : vector<1x64x128xbf16> to vector<64x128xbf16>
    %cst_45 = arith.constant dense<0.000000e+00> : vector<8x128xf32>
    %125 = tpu.matmul %122, %124, %cst_45 {dimension_numbers = #tpu.dot_dimension_numbers<[1], [0], [0], [1], [0, 0, 1, 1], [], []>} : vector<8x64xbf16>, vector<64x128xbf16>, vector<8x128xf32> -> vector<8x128xf32>
    %126 = arith.addf %94, %125 : vector<8x128xf32>
    %c0_46 = arith.constant 0 : index
    %c0_47 = arith.constant 0 : index
    %127 = vector.load %arg15[%c0_46, %c0_47] : memref<8x128xf32, #tpu.memory_space<vmem>>, vector<8x128xf32>
    tpu.vector_store %arg15[%c0_46, %c0_47], %126 {strides = array<i32>} : memref<8x128xf32, #tpu.memory_space<vmem>>, vector<8x128xf32>,
    %c1_i32 = arith.constant 1 : i32
    %128 = arith.cmpi eq, %arg0, %c1_i32 : i32
    %129 = arith.extui %128 : i1 to i32
    %c0_i32_48 = arith.constant 0 : i32
    %130 = arith.cmpi ne, %129, %c0_i32_48 : i32
    scf.if %130 {
      %c0_49 = arith.constant 0 : index
      %c0_50 = arith.constant 0 : index
      %131 = vector.load %arg13[%c0_49, %c0_50] : memref<1x128xf32, #tpu.memory_space<vmem>>, vector<1x128xf32>
      %132 = arith.mulf %126, %126 : vector<8x128xf32>
      %cst_51 = arith.constant dense<0.000000e+00> : vector<8xf32>
      %133 = vector.multi_reduction <add>, %132, %cst_51 [1] : vector<8x128xf32> to vector<8xf32>
      %134 = vector.shape_cast %133 : vector<8xf32> to vector<8x1xf32>
      %cst_52 = arith.constant 3.125000e-02 : f32
      %135 = vector.broadcast %cst_52 : f32 to vector<8x1xf32>
      %136 = arith.mulf %134, %135 : vector<8x1xf32>
      %cst_53 = arith.constant 9.99999974E-6 : f32
      %137 = vector.broadcast %cst_53 : f32 to vector<8x1xf32>
      %138 = arith.addf %136, %137 : vector<8x1xf32>
      %139 = math.rsqrt %138 : vector<8x1xf32>
      %140 = vector.broadcast %139 : vector<8x1xf32> to vector<8x128xf32>
      %141 = arith.mulf %126, %140 : vector<8x128xf32>
      %142 = vector.broadcast %131 : vector<1x128xf32> to vector<8x128xf32>
      %143 = arith.mulf %141, %142 : vector<8x128xf32>
      %c0_54 = arith.constant 0 : index
      %c0_55 = arith.constant 0 : index
      %144 = vector.load %arg14[%c0_54, %c0_55] : memref<8x128xf32, #tpu.memory_space<vmem>>, vector<8x128xf32>
      tpu.vector_store %arg14[%c0_54, %c0_55], %143 {strides = array<i32>} : memref<8x128xf32, #tpu.memory_space<vmem>>, vector<8x128xf32>,
    } else {
    }
    return
  }
  func.func @transform_0(%arg0: i32) -> (i32, i32) {
    %c0_i32 = arith.constant 0 : i32
    %c0_i32_0 = arith.constant 0 : i32
    %c0_i32_1 = arith.constant 0 : i32
    return %c0_i32, %c0_i32_0 : i32, i32
  }
  func.func @transform_1(%arg0: i32) -> (i32, i32) {
    %c0_i32 = arith.constant 0 : i32
    %c0_i32_0 = arith.constant 0 : i32
    %c0_i32_1 = arith.constant 0 : i32
    return %c0_i32, %c0_i32_0 : i32, i32
  }
  func.func @transform_2(%arg0: i32) -> (i32, i32) {
    %c0_i32 = arith.constant 0 : i32
    %c0_i32_0 = arith.constant 0 : i32
    %c0_i32_1 = arith.constant 0 : i32
    return %c0_i32, %c0_i32_0 : i32, i32
  }
  func.func @transform_3(%arg0: i32) -> (i32, i32) {
    %c0_i32 = arith.constant 0 : i32
    %c0_i32_0 = arith.constant 0 : i32
    %c0_i32_1 = arith.constant 0 : i32
    return %c0_i32, %c0_i32_0 : i32, i32
  }
  func.func @transform_4(%arg0: i32) -> (i32, i32) {
    %c0_i32 = arith.constant 0 : i32
    %c0_i32_0 = arith.constant 0 : i32
    %c0_i32_1 = arith.constant 0 : i32
    return %c0_i32, %c0_i32_0 : i32, i32
  }
  func.func @transform_5(%arg0: i32) -> (i32, i32, i32) {
    %c0_i32 = arith.constant 0 : i32
    %c0_i32_0 = arith.constant 0 : i32
    %c0_i32_1 = arith.constant 0 : i32
    return %arg0, %c0_i32, %c0_i32_0 : i32, i32, i32
  }
  func.func @transform_6(%arg0: i32) -> (i32, i32, i32) {
    %c0_i32 = arith.constant 0 : i32
    %c0_i32_0 = arith.constant 0 : i32
    %c0_i32_1 = arith.constant 0 : i32
    return %arg0, %c0_i32, %c0_i32_0 : i32, i32, i32
  }
  func.func @transform_7(%arg0: i32) -> (i32, i32, i32) {
    %c0_i32 = arith.constant 0 : i32
    %c0_i32_0 = arith.constant 0 : i32
    %c0_i32_1 = arith.constant 0 : i32
    return %arg0, %c0_i32, %c0_i32_0 : i32, i32, i32
  }
  func.func @transform_8(%arg0: i32) -> (i32, i32, i32) {
    %c0_i32 = arith.constant 0 : i32
    %c0_i32_0 = arith.constant 0 : i32
    %c0_i32_1 = arith.constant 0 : i32
    return %arg0, %c0_i32, %c0_i32_0 : i32, i32, i32
  }
  func.func @transform_9(%arg0: i32) -> (i32, i32, i32) {
    %c0_i32 = arith.constant 0 : i32
    %c0_i32_0 = arith.constant 0 : i32
    %c0_i32_1 = arith.constant 0 : i32
    return %arg0, %c0_i32, %c0_i32_0 : i32, i32, i32
  }
  func.func @transform_10(%arg0: i32) -> (i32, i32, i32) {
    %c0_i32 = arith.constant 0 : i32
    %c0_i32_0 = arith.constant 0 : i32
    %c0_i32_1 = arith.constant 0 : i32
    return %arg0, %c0_i32, %c0_i32_0 : i32, i32, i32
  }
  func.func @transform_11(%arg0: i32) -> (i32, i32, i32) {
    %c0_i32 = arith.constant 0 : i32
    %c0_i32_0 = arith.constant 0 : i32
    %c0_i32_1 = arith.constant 0 : i32
    return %arg0, %c0_i32, %c0_i32_0 : i32, i32, i32
  }
  func.func @transform_12(%arg0: i32) -> (i32, i32) {
    %c0_i32 = arith.constant 0 : i32
    %c0_i32_0 = arith.constant 0 : i32
    %c0_i32_1 = arith.constant 0 : i32
    return %c0_i32, %c0_i32_0 : i32, i32
  }
  func.func @transform_13(%arg0: i32) -> (i32, i32) {
    %c0_i32 = arith.constant 0 : i32
    %c0_i32_0 = arith.constant 0 : i32
    %c0_i32_1 = arith.constant 0 : i32
    return %c0_i32, %c0_i32_0 : i32, i32
  }
}

</mosaic_0001>

<llo_original>
// kernel: tile.19
$region0: #{tile.19}
  %s0 = inlined_call_operand.vmem [shape: f32[8,4,8], index: 0, kind: input, shape index: {}]
  %s1 = inlined_call_operand.vmem [shape: f32[8,32], index: 1, kind: output, shape index: {}]
  $region1: #{tile.19} parent=0
    #allocation0 [shape = 'u8[32768]{0}', space=vmem, size = 0x8000, scoped, tag = 'scoped mem for input reshape']
    %s3 = ssub.s32 16, 1
    %s4 = scalar_lea.vmem %s0, 28
    %v5 = vld [vmem:[%s4] sm:%s3]
    %s6 = scalar_lea.vmem [#allocation0], 56
    %7 = vst [vmem:[%s6] sm:%s3] %v5
    %s8 = scalar_lea.vmem %s0, 24
    %v9 = vld [vmem:[%s8] sm:%s3]
    %s10 = scalar_lea.vmem [#allocation0], 48
    %11 = vst [vmem:[%s10] sm:%s3] %v9
    %s12 = scalar_lea.vmem %s0, 20
    %v13 = vld [vmem:[%s12] sm:%s3]
    %s14 = scalar_lea.vmem [#allocation0], 40
    %15 = vst [vmem:[%s14] sm:%s3] %v13
    %s16 = scalar_lea.vmem %s0, 16
    %v17 = vld [vmem:[%s16] sm:%s3]
    %s18 = scalar_lea.vmem [#allocation0], 32
    %19 = vst [vmem:[%s18] sm:%s3] %v17
    %s20 = scalar_lea.vmem %s0, 12
    %v21 = vld [vmem:[%s20] sm:%s3]
    %s22 = scalar_lea.vmem [#allocation0], 24
    %23 = vst [vmem:[%s22] sm:%s3] %v21
    %s24 = scalar_lea.vmem %s0, 8
    %v25 = vld [vmem:[%s24] sm:%s3]
    %s26 = scalar_lea.vmem [#allocation0], 16
    %27 = vst [vmem:[%s26] sm:%s3] %v25
    %s28 = scalar_lea.vmem %s0, 4
    %v29 = vld [vmem:[%s28] sm:%s3]
    %s30 = scalar_lea.vmem [#allocation0], 8
    %31 = vst [vmem:[%s30] sm:%s3] %v29
    %v32 = vld [vmem:[%s0] sm:%s3]
    %33 = vst [vmem:[#allocation0] sm:%s3] %v32
    %v34 = vld [vmem:[#allocation0] ss:$8 sm:$0xf]
    %v35 = vld [vmem:[#allocation0] ss:$8 sm:$0xf0]
    %vm36 = vcmask 1047556
    %v37 = vsel %vm36, %v35, %v34
    %vm38 = vcmask 64512
    %39 = vst.msk [vmem:[%s1] sm:$0xff] %vm38, %v37
    %s40 = scalar_lea.vmem [#allocation0], 3
    %v41 = vld [vmem:[%s40] ss:$8 sm:$0xf]
    %s42 = scalar_lea.vmem [#allocation0], 3
    %v43 = vld [vmem:[%s42] ss:$8 sm:$0xf0]
    %vm44 = vcmask 1047556
    %v45 = vsel %vm44, %v43, %v41
    %46 = vrot.lane.b32.xlu0 %v45, 24
    %v47 = vpop.permute.xlu0 %46
    %vm48 = vcmask 261312
    %49 = vst.msk [vmem:[%s1] sm:$0xff] %vm48, %v47
    %s50 = scalar_lea.vmem [#allocation0], 2
    %v51 = vld [vmem:[%s50] ss:$8 sm:$0xf]
    %s52 = scalar_lea.vmem [#allocation0], 2
    %v53 = vld [vmem:[%s52] ss:$8 sm:$0xf0]
    %vm54 = vcmask 1047556
    %v55 = vsel %vm54, %v53, %v51
    %56 = vrot.lane.b32.xlu0 %v55, 16
    %v57 = vpop.permute.xlu0 %56
    %vm58 = vcmask 195712
    %59 = vst.msk [vmem:[%s1] sm:$0xff] %vm58, %v57
    %s60 = scalar_lea.vmem [#allocation0], 1
    %v61 = vld [vmem:[%s60] ss:$8 sm:$0xf]
    %s62 = scalar_lea.vmem [#allocation0], 1
    %v63 = vld [vmem:[%s62] ss:$8 sm:$0xf0]
    %vm64 = vcmask 1047556
    %v65 = vsel %vm64, %v63, %v61
    %66 = vrot.lane.b32.xlu0 %v65, 8
    %v67 = vpop.permute.xlu0 %66
    %vm68 = vcmask 130112
    %69 = vst.msk [vmem:[%s1] sm:$0xff] %vm68, %v67

// kernel: chatglm_forward.1
$region0: #{chatglm_forward.1}
  #allocation0 [shape = 'u32[]', space=smem, size = 0x4, offset = 0x4, fixed_abs, tag = 'smem constant byte address 0x4 - core index']
  #allocation1 [shape = 'u32[72,128]{1,0:T(1,128)}', space=vmem, size = 0x9000, scoped, tag = 'internal scratch']
  #allocation2 [shape = 'f32[8,128]{1,0:T(8,128)}', space=vmem, size = 0x1000, scoped, tag = 'scratch operand']
  %s0 = inlined_call_operand.vmem [shape: s32[8,1], index: 0, kind: input, shape index: {}]
  %s1 = inlined_call_operand.hbm [shape: bf16[128,128], index: 1, kind: input, shape index: {}]
  %s2 = inlined_call_operand.vmem [shape: f32[8,128], index: 2, kind: input, shape index: {}]
  %s3 = inlined_call_operand.vmem [shape: f32[8,128], index: 3, kind: input, shape index: {}]
  %s4 = inlined_call_operand.vmem [shape: f32[128,128], index: 4, kind: input, shape index: {}]
  %s5 = inlined_call_operand.vmem [shape: f32[2,1,128], index: 5, kind: input, shape index: {}]
  %s6 = inlined_call_operand.vmem [shape: bf16[2,128,128], index: 6, kind: input, shape index: {}]
  %s7 = inlined_call_operand.vmem [shape: f32[2,1,128], index: 7, kind: input, shape index: {}]
  %s8 = inlined_call_operand.vmem [shape: bf16[2,32,128], index: 8, kind: input, shape index: {}]
  %s9 = inlined_call_operand.vmem [shape: f32[2,1,128], index: 9, kind: input, shape index: {}]
  %s10 = inlined_call_operand.hbm [shape: bf16[2,128,128], index: 10, kind: input, shape index: {}]
  %s11 = inlined_call_operand.hbm [shape: bf16[2,64,128], index: 11, kind: input, shape index: {}]
  %s12 = inlined_call_operand.vmem [shape: f32[1,128], index: 12, kind: input, shape index: {}]
  %s13 = inlined_call_operand.hbm [shape: f32[8,128], index: 13, kind: output, shape index: {}]
  %s14 = sld [smem:[#allocation0]]
  $region105: #{chatglm_forward.1} parent=0
    _
  %s16 = ssub.s32 1, %s14
  %s17 = scalar_select 0, %s16, %s14
  $region1: #{chatglm_forward.1} parent=0
    #allocation3 [shape = 'u8[32768]{0}', space=vmem, size = 0x8000, scoped, tag = 'input window, operand 1, single buffered']
    #allocation4 [shape = 's32[2]{0}', space=sflag, size = 0x8, scoped, tag = 'scoped memory for chatglm_forward.1']
    #allocation5 [shape = 's32[2]{0}', space=sflag, size = 0x8, scoped, tag = 'scoped memory for chatglm_forward.1']
    #allocation6 [shape = 'u8[65536]{0}', space=vmem, size = 0x10000, scoped, tag = 'input window, operand 10']
    #allocation7 [shape = 's32[2]{0}', space=sflag, size = 0x8, scoped, tag = 'scoped memory for chatglm_forward.1']
    #allocation8 [shape = 'u8[32768]{0}', space=vmem, size = 0x8000, scoped, tag = 'input window, operand 11']
    #allocation9 [shape = 'u8[4096]{0}', space=vmem, size = 0x1000, scoped, tag = 'output window, operand 0, single buffered']
    %18 = vsyncpa [#allocation4], 0
    %19 = vsyncpa [#allocation7], 0
    %s20 = scalar_lea.sflag [#allocation7], 1
    %21 = vsyncpa %s20, 0
    %22 = vsyncpa [#allocation5], 0
    loop: start=0, step=1, limit=4
    $region2: #{chatglm_forward.1} parent=1 // loop_pre_header
      _
    $region3: #{chatglm_forward.1} parent=1 // loop_header
      %s24 = sphi 0, %s28
      %p25 = scmp.ge.s32.totalorder %s24, 4
      %s32 = sphi 0, %s32
      %s34 = sphi 0, %s32
      %s35 = sphi 0, %s34
      %s49 = sphi 0, %s35
      %s53 = sphi 0, %s53
      %s55 = sphi 0, %s53
      %s56 = sphi 0, %s55
      %s70 = sphi 0, %s56
      %s74 = sphi 0, %s74
      %s76 = sphi 0, %s74
      %s77 = sphi 0, %s76
      %s91 = sphi 0, %s77
      %s95 = sphi 0, %s95
      %s97 = sphi 0, %s95
      %s98 = sphi 0, %s97
      %s112 = sphi 0, %s98
      %s116 = sphi 0, %s116
      %s118 = sphi 0, %s116
      %s119 = sphi 0, %s118
      %s133 = sphi 0, %s119
      %s139 = sphi 0, %s141
      %s142 = sphi 0, %s139
      %s143 = sphi 0, %s142
      %s159 = sphi 0, %s143
      %s165 = sphi 0, %s167
      %s168 = sphi 0, %s165
      %s169 = sphi 0, %s168
      %s185 = sphi 0, %s169
      %s191 = sphi 0, %s193
      %s194 = sphi 0, %s191
      %s195 = sphi 0, %s194
      %s211 = sphi 0, %s195
      %s217 = sphi 0, %s219
      %s220 = sphi 0, %s217
      %s221 = sphi 0, %s220
      %s237 = sphi 0, %s221
      %s243 = sphi 0, %s245
      %s246 = sphi 0, %s243
      %s247 = sphi 0, %s246
      %s263 = sphi 0, %s247
      %s269 = sphi 0, %s271
      %s272 = sphi 0, %s269
      %s273 = sphi 0, %s272
      %s289 = sphi 0, %s273
      %s295 = sphi 0, %s297
      %s298 = sphi 0, %s295
      %s299 = sphi 0, %s298
      %s315 = sphi 0, %s299
      %s319 = sphi 0, %s319
      %s321 = sphi 0, %s319
      %s322 = sphi 0, %s321
      %s336 = sphi 0, %s322
      %s340 = sphi 0, %s340
      %s342 = sphi 0, %s340
      %s343 = sphi 0, %s342
      %s357 = sphi 0, %s343
    $region4: #{chatglm_forward.1} parent=1 // loop_header_branch
      %27 = sbr.rel (%p25) target = $region8
    $region5: #{chatglm_forward.1} parent=1 // loop_body
      %s29 = ssub.s32 %s24, 1
      %s30 = ssub.s32 %s24, 2
      %s31 = sadd.s32 %s24, 1
      %s33 = sadd.s32 %s32, 1
      %p36 = scmp.eq.s32.totalorder %s24, 1
      %p37 = scmp.ne.s32.totalorder %s32, %s34
      %p38 = scmp.eq.s32.totalorder %s24, 0
      %p39 = por %p37, %p38
      %p40 = scmp.ne.s32.totalorder %s32, %s34
      %p41 = scmp.eq.s32.totalorder %s29, 1
      %p42 = por %p40, %p41
      %p43 = scmp.ne.s32.totalorder %s34, %s35
      %p44 = scmp.eq.s32.totalorder %s29, 0
      %p45 = por %p43, %p44
      %p46 = scmp.ne.s32.totalorder %s34, %s35
      %p47 = scmp.eq.s32.totalorder %s30, 1
      %p48 = por %p46, %p47
      %p50 = scmp.ne.s32.totalorder %s35, %s49
      %p51 = scmp.eq.s32.totalorder %s30, 0
      %p52 = por %p50, %p51
      %s54 = sadd.s32 %s53, 1
      %p57 = scmp.eq.s32.totalorder %s24, 1
      %p58 = scmp.ne.s32.totalorder %s53, %s55
      %p59 = scmp.eq.s32.totalorder %s24, 0
      %p60 = por %p58, %p59
      %p61 = scmp.ne.s32.totalorder %s53, %s55
      %p62 = scmp.eq.s32.totalorder %s29, 1
      %p63 = por %p61, %p62
      %p64 = scmp.ne.s32.totalorder %s55, %s56
      %p65 = scmp.eq.s32.totalorder %s29, 0
      %p66 = por %p64, %p65
      %p67 = scmp.ne.s32.totalorder %s55, %s56
      %p68 = scmp.eq.s32.totalorder %s30, 1
      %p69 = por %p67, %p68
      %p71 = scmp.ne.s32.totalorder %s56, %s70
      %p72 = scmp.eq.s32.totalorder %s30, 0
      %p73 = por %p71, %p72
      %s75 = sadd.s32 %s74, 1
      %p78 = scmp.eq.s32.totalorder %s24, 1
      %p79 = scmp.ne.s32.totalorder %s74, %s76
      %p80 = scmp.eq.s32.totalorder %s24, 0
      %p81 = por %p79, %p80
      %p82 = scmp.ne.s32.totalorder %s74, %s76
      %p83 = scmp.eq.s32.totalorder %s29, 1
      %p84 = por %p82, %p83
      %p85 = scmp.ne.s32.totalorder %s76, %s77
      %p86 = scmp.eq.s32.totalorder %s29, 0
      %p87 = por %p85, %p86
      %p88 = scmp.ne.s32.totalorder %s76, %s77
      %p89 = scmp.eq.s32.totalorder %s30, 1
      %p90 = por %p88, %p89
      %p92 = scmp.ne.s32.totalorder %s77, %s91
      %p93 = scmp.eq.s32.totalorder %s30, 0
      %p94 = por %p92, %p93
      %s96 = sadd.s32 %s95, 1
      %p99 = scmp.eq.s32.totalorder %s24, 1
      %p100 = scmp.ne.s32.totalorder %s95, %s97
      %p101 = scmp.eq.s32.totalorder %s24, 0
      %p102 = por %p100, %p101
      %p103 = scmp.ne.s32.totalorder %s95, %s97
      %p104 = scmp.eq.s32.totalorder %s29, 1
      %p105 = por %p103, %p104
      %p106 = scmp.ne.s32.totalorder %s97, %s98
      %p107 = scmp.eq.s32.totalorder %s29, 0
      %p108 = por %p106, %p107
      %p109 = scmp.ne.s32.totalorder %s97, %s98
      %p110 = scmp.eq.s32.totalorder %s30, 1
      %p111 = por %p109, %p110
      %p113 = scmp.ne.s32.totalorder %s98, %s112
      %p114 = scmp.eq.s32.totalorder %s30, 0
      %p115 = por %p113, %p114
      %s117 = sadd.s32 %s116, 1
      %p120 = scmp.eq.s32.totalorder %s24, 1
      %p121 = scmp.ne.s32.totalorder %s116, %s118
      %p122 = scmp.eq.s32.totalorder %s24, 0
      %p123 = por %p121, %p122
      %p124 = scmp.ne.s32.totalorder %s116, %s118
      %p125 = scmp.eq.s32.totalorder %s29, 1
      %p126 = por %p124, %p125
      %p127 = scmp.ne.s32.totalorder %s118, %s119
      %p128 = scmp.eq.s32.totalorder %s29, 0
      %p129 = por %p127, %p128
      %p130 = scmp.ne.s32.totalorder %s118, %s119
      %p131 = scmp.eq.s32.totalorder %s30, 1
      %p132 = por %p130, %p131
      %p134 = scmp.ne.s32.totalorder %s119, %s133
      %p135 = scmp.eq.s32.totalorder %s30, 0
      %p136 = por %p134, %p135
      %s137 = ssub.s32 %s24, %s31
      %p138 = scmp.eq.s32.totalorder %s137, 0
      %s140 = sadd.s32 %s139, 1
      %s141 = scalar_select %p138, %s139, %s140
      %p144 = pneg %p138
      %p145 = scmp.eq.s32.totalorder %s24, 1
      %p146 = por %p144, %p145
      %p147 = scmp.ne.s32.totalorder %s139, %s142
      %p148 = scmp.eq.s32.totalorder %s24, 0
      %p149 = por %p147, %p148
      %p150 = scmp.ne.s32.totalorder %s139, %s142
      %p151 = scmp.eq.s32.totalorder %s29, 1
      %p152 = por %p150, %p151
      %p153 = scmp.ne.s32.totalorder %s142, %s143
      %p154 = scmp.eq.s32.totalorder %s29, 0
      %p155 = por %p153, %p154
      %p156 = scmp.ne.s32.totalorder %s142, %s143
      %p157 = scmp.eq.s32.totalorder %s30, 1
      %p158 = por %p156, %p157
      %p160 = scmp.ne.s32.totalorder %s143, %s159
      %p161 = scmp.eq.s32.totalorder %s30, 0
      %p162 = por %p160, %p161
      %s163 = ssub.s32 %s24, %s31
      %p164 = scmp.eq.s32.totalorder %s163, 0
      %s166 = sadd.s32 %s165, 1
      %s167 = scalar_select %p164, %s165, %s166
      %p170 = pneg %p164
      %p171 = scmp.eq.s32.totalorder %s24, 1
      %p172 = por %p170, %p171
      %p173 = scmp.ne.s32.totalorder %s165, %s168
      %p174 = scmp.eq.s32.totalorder %s24, 0
      %p175 = por %p173, %p174
      %p176 = scmp.ne.s32.totalorder %s165, %s168
      %p177 = scmp.eq.s32.totalorder %s29, 1
      %p178 = por %p176, %p177
      %p179 = scmp.ne.s32.totalorder %s168, %s169
      %p180 = scmp.eq.s32.totalorder %s29, 0
      %p181 = por %p179, %p180
      %p182 = scmp.ne.s32.totalorder %s168, %s169
      %p183 = scmp.eq.s32.totalorder %s30, 1
      %p184 = por %p182, %p183
      %p186 = scmp.ne.s32.totalorder %s169, %s185
      %p187 = scmp.eq.s32.totalorder %s30, 0
      %p188 = por %p186, %p187
      %s189 = ssub.s32 %s24, %s31
      %p190 = scmp.eq.s32.totalorder %s189, 0
      %s192 = sadd.s32 %s191, 1
      %s193 = scalar_select %p190, %s191, %s192
      %p196 = pneg %p190
      %p197 = scmp.eq.s32.totalorder %s24, 1
      %p198 = por %p196, %p197
      %p199 = scmp.ne.s32.totalorder %s191, %s194
      %p200 = scmp.eq.s32.totalorder %s24, 0
      %p201 = por %p199, %p200
      %p202 = scmp.ne.s32.totalorder %s191, %s194
      %p203 = scmp.eq.s32.totalorder %s29, 1
      %p204 = por %p202, %p203
      %p205 = scmp.ne.s32.totalorder %s194, %s195
      %p206 = scmp.eq.s32.totalorder %s29, 0
      %p207 = por %p205, %p206
      %p208 = scmp.ne.s32.totalorder %s194, %s195
      %p209 = scmp.eq.s32.totalorder %s30, 1
      %p210 = por %p208, %p209
      %p212 = scmp.ne.s32.totalorder %s195, %s211
      %p213 = scmp.eq.s32.totalorder %s30, 0
      %p214 = por %p212, %p213
      %s215 = ssub.s32 %s24, %s31
      %p216 = scmp.eq.s32.totalorder %s215, 0
      %s218 = sadd.s32 %s217, 1
      %s219 = scalar_select %p216, %s217, %s218
      %p222 = pneg %p216
      %p223 = scmp.eq.s32.totalorder %s24, 1
      %p224 = por %p222, %p223
      %p225 = scmp.ne.s32.totalorder %s217, %s220
      %p226 = scmp.eq.s32.totalorder %s24, 0
      %p227 = por %p225, %p226
      %p228 = scmp.ne.s32.totalorder %s217, %s220
      %p229 = scmp.eq.s32.totalorder %s29, 1
      %p230 = por %p228, %p229
      %p231 = scmp.ne.s32.totalorder %s220, %s221
      %p232 = scmp.eq.s32.totalorder %s29, 0
      %p233 = por %p231, %p232
      %p234 = scmp.ne.s32.totalorder %s220, %s221
      %p235 = scmp.eq.s32.totalorder %s30, 1
      %p236 = por %p234, %p235
      %p238 = scmp.ne.s32.totalorder %s221, %s237
      %p239 = scmp.eq.s32.totalorder %s30, 0
      %p240 = por %p238, %p239
      %s241 = ssub.s32 %s24, %s31
      %p242 = scmp.eq.s32.totalorder %s241, 0
      %s244 = sadd.s32 %s243, 1
      %s245 = scalar_select %p242, %s243, %s244
      %p248 = pneg %p242
      %p249 = scmp.eq.s32.totalorder %s24, 1
      %p250 = por %p248, %p249
      %p251 = scmp.ne.s32.totalorder %s243, %s246
      %p252 = scmp.eq.s32.totalorder %s24, 0
      %p253 = por %p251, %p252
      %p254 = scmp.ne.s32.totalorder %s243, %s246
      %p255 = scmp.eq.s32.totalorder %s29, 1
      %p256 = por %p254, %p255
      %p257 = scmp.ne.s32.totalorder %s246, %s247
      %p258 = scmp.eq.s32.totalorder %s29, 0
      %p259 = por %p257, %p258
      %p260 = scmp.ne.s32.totalorder %s246, %s247
      %p261 = scmp.eq.s32.totalorder %s30, 1
      %p262 = por %p260, %p261
      %p264 = scmp.ne.s32.totalorder %s247, %s263
      %p265 = scmp.eq.s32.totalorder %s30, 0
      %p266 = por %p264, %p265
      %s267 = ssub.s32 %s24, %s31
      %p268 = scmp.eq.s32.totalorder %s267, 0
      %s270 = sadd.s32 %s269, 1
      %s271 = scalar_select %p268, %s269, %s270
      %p274 = pneg %p268
      %p275 = scmp.eq.s32.totalorder %s24, 1
      %p276 = por %p274, %p275
      %p277 = scmp.ne.s32.totalorder %s269, %s272
      %p278 = scmp.eq.s32.totalorder %s24, 0
      %p279 = por %p277, %p278
      %p280 = scmp.ne.s32.totalorder %s269, %s272
      %p281 = scmp.eq.s32.totalorder %s29, 1
      %p282 = por %p280, %p281
      %p283 = scmp.ne.s32.totalorder %s272, %s273
      %p284 = scmp.eq.s32.totalorder %s29, 0
      %p285 = por %p283, %p284
      %p286 = scmp.ne.s32.totalorder %s272, %s273
      %p287 = scmp.eq.s32.totalorder %s30, 1
      %p288 = por %p286, %p287
      %p290 = scmp.ne.s32.totalorder %s273, %s289
      %p291 = scmp.eq.s32.totalorder %s30, 0
      %p292 = por %p290, %p291
      %s293 = ssub.s32 %s24, %s31
      %p294 = scmp.eq.s32.totalorder %s293, 0
      %s296 = sadd.s32 %s295, 1
      %s297 = scalar_select %p294, %s295, %s296
      %p300 = pneg %p294
      %p301 = scmp.eq.s32.totalorder %s24, 1
      %p302 = por %p300, %p301
      %p303 = scmp.ne.s32.totalorder %s295, %s298
      %p304 = scmp.eq.s32.totalorder %s24, 0
      %p305 = por %p303, %p304
      %p306 = scmp.ne.s32.totalorder %s295, %s298
      %p307 = scmp.eq.s32.totalorder %s29, 1
      %p308 = por %p306, %p307
      %p309 = scmp.ne.s32.totalorder %s298, %s299
      %p310 = scmp.eq.s32.totalorder %s29, 0
      %p311 = por %p309, %p310
      %p312 = scmp.ne.s32.totalorder %s298, %s299
      %p313 = scmp.eq.s32.totalorder %s30, 1
      %p314 = por %p312, %p313
      %p316 = scmp.ne.s32.totalorder %s299, %s315
      %p317 = scmp.eq.s32.totalorder %s30, 0
      %p318 = por %p316, %p317
      %s320 = sadd.s32 %s319, 1
      %p323 = scmp.eq.s32.totalorder %s24, 1
      %p324 = scmp.ne.s32.totalorder %s319, %s321
      %p325 = scmp.eq.s32.totalorder %s24, 0
      %p326 = por %p324, %p325
      %p327 = scmp.ne.s32.totalorder %s319, %s321
      %p328 = scmp.eq.s32.totalorder %s29, 1
      %p329 = por %p327, %p328
      %p330 = scmp.ne.s32.totalorder %s321, %s322
      %p331 = scmp.eq.s32.totalorder %s29, 0
      %p332 = por %p330, %p331
      %p333 = scmp.ne.s32.totalorder %s321, %s322
      %p334 = scmp.eq.s32.totalorder %s30, 1
      %p335 = por %p333, %p334
      %p337 = scmp.ne.s32.totalorder %s322, %s336
      %p338 = scmp.eq.s32.totalorder %s30, 0
      %p339 = por %p337, %p338
      %s341 = sadd.s32 %s340, 1
      %p344 = scmp.eq.s32.totalorder %s24, 1
      %p345 = scmp.ne.s32.totalorder %s340, %s342
      %p346 = scmp.eq.s32.totalorder %s24, 0
      %p347 = por %p345, %p346
      %p348 = scmp.ne.s32.totalorder %s340, %s342
      %p349 = scmp.eq.s32.totalorder %s29, 1
      %p350 = por %p348, %p349
      %p351 = scmp.ne.s32.totalorder %s342, %s343
      %p352 = scmp.eq.s32.totalorder %s29, 0
      %p353 = por %p351, %p352
      %p354 = scmp.ne.s32.totalorder %s342, %s343
      %p355 = scmp.eq.s32.totalorder %s30, 1
      %p356 = por %p354, %p355
      %p358 = scmp.ne.s32.totalorder %s343, %s357
      %p359 = scmp.eq.s32.totalorder %s30, 0
      %p360 = por %p358, %p359
      %p361 = scmp.le.s32.totalorder 1, %s24
      %p362 = scmp.lt.s32.totalorder %s24, 3
      %p363 = pnand %p361, %p362
      %p364 = pneg %p363
      // Predicated region
      $region9: #{chatglm_forward.1} parent=5 // pred_check
        _
      $region10: #{chatglm_forward.1} parent=5 // pred_check_branch
        %366 = sbr.rel (%p363) target = $region12
      $region11: #{chatglm_forward.1} parent=5 // pred_region
        %s367 = ssub.s32 %s24, 1
        // Predicated region
        $region13: #{chatglm_forward.1} parent=11 // pred_check
          %p368 = pneg %p45
        $region14: #{chatglm_forward.1} parent=11 // pred_check_branch
          %370 = sbr.rel (%p368) target = $region16
        $region15: #{chatglm_forward.1} parent=11 // pred_region
          _
        $region16: #{chatglm_forward.1} parent=11 // pred_fallthru
          _
        // Predicated region
        $region17: #{chatglm_forward.1} parent=11 // pred_check
          %p371 = pneg %p66
        $region18: #{chatglm_forward.1} parent=11 // pred_check_branch
          %373 = sbr.rel (%p371) target = $region20
        $region19: #{chatglm_forward.1} parent=11 // pred_region
          %375 = vsyncadd [#allocation4], 0
          %s376 = sshll.u32 %s1, 4
          %s377 = int_to_ptr.hbm [resolvable:$true] %s376
          %s378 = sshll.u32 [#allocation3], 4
          %s379 = int_to_ptr.vmem [resolvable:$true] %s378
          %384 = dma.hbm_to_vmem [thread:$0]  %s377, 1024, %s379, [#allocation4], 64, 64, 4
        $region20: #{chatglm_forward.1} parent=11 // pred_fallthru
          _
        // Predicated region
        $region21: #{chatglm_forward.1} parent=11 // pred_check
          %p385 = pneg %p87
        $region22: #{chatglm_forward.1} parent=11 // pred_check_branch
          %387 = sbr.rel (%p385) target = $region24
        $region23: #{chatglm_forward.1} parent=11 // pred_region
          _
        $region24: #{chatglm_forward.1} parent=11 // pred_fallthru
          _
        // Predicated region
        $region25: #{chatglm_forward.1} parent=11 // pred_check
          %p388 = pneg %p108
        $region26: #{chatglm_forward.1} parent=11 // pred_check_branch
          %390 = sbr.rel (%p388) target = $region28
        $region27: #{chatglm_forward.1} parent=11 // pred_region
          _
        $region28: #{chatglm_forward.1} parent=11 // pred_fallthru
          _
        // Predicated region
        $region29: #{chatglm_forward.1} parent=11 // pred_check
          %p391 = pneg %p129
        $region30: #{chatglm_forward.1} parent=11 // pred_check_branch
          %393 = sbr.rel (%p391) target = $region32
        $region31: #{chatglm_forward.1} parent=11 // pred_region
          _
        $region32: #{chatglm_forward.1} parent=11 // pred_fallthru
          _
        // Predicated region
        $region33: #{chatglm_forward.1} parent=11 // pred_check
          %p394 = pneg %p332
        $region34: #{chatglm_forward.1} parent=11 // pred_check_branch
          %396 = sbr.rel (%p394) target = $region36
        $region35: #{chatglm_forward.1} parent=11 // pred_region
          _
        $region36: #{chatglm_forward.1} parent=11 // pred_fallthru
          _
      $region12: #{chatglm_forward.1} parent=5 // pred_fallthru
        _
      %p397 = scmp.lt.s32.totalorder %s24, 2
      // Predicated region
      $region37: #{chatglm_forward.1} parent=5 // pred_check
        %p398 = pneg %p397
      $region38: #{chatglm_forward.1} parent=5 // pred_check_branch
        %400 = sbr.rel (%p398) target = $region40
      $region39: #{chatglm_forward.1} parent=5 // pred_region
        // Predicated region
        $region41: #{chatglm_forward.1} parent=39 // pred_check
          %p401 = pneg %p149
        $region42: #{chatglm_forward.1} parent=39 // pred_check_branch
          %403 = sbr.rel (%p401) target = $region44
        $region43: #{chatglm_forward.1} parent=39 // pred_region
          %p404 = scmp.lt.s32.totalorder %s24, 1
          %s405 = scalar_select %p404, %s24, 1
          %s406 = scalar_lea.vmem %s5, %s405
        $region44: #{chatglm_forward.1} parent=39 // pred_fallthru
          _
        // Predicated region
        $region45: #{chatglm_forward.1} parent=39 // pred_check
          %p407 = pneg %p175
        $region46: #{chatglm_forward.1} parent=39 // pred_check_branch
          %409 = sbr.rel (%p407) target = $region48
        $region47: #{chatglm_forward.1} parent=39 // pred_region
          %p410 = scmp.lt.s32.totalorder %s24, 1
          %s411 = scalar_select %p410, %s24, 1
          %s412 = smul.addr %s411, 16
          %s413 = smul.addr %s412, 4
          %s414 = scalar_lea.vmem %s6, %s413
        $region48: #{chatglm_forward.1} parent=39 // pred_fallthru
          _
        // Predicated region
        $region49: #{chatglm_forward.1} parent=39 // pred_check
          %p415 = pneg %p201
        $region50: #{chatglm_forward.1} parent=39 // pred_check_branch
          %417 = sbr.rel (%p415) target = $region52
        $region51: #{chatglm_forward.1} parent=39 // pred_region
          %p418 = scmp.lt.s32.totalorder %s24, 1
          %s419 = scalar_select %p418, %s24, 1
          %s420 = scalar_lea.vmem %s7, %s419
        $region52: #{chatglm_forward.1} parent=39 // pred_fallthru
          _
        // Predicated region
        $region53: #{chatglm_forward.1} parent=39 // pred_check
          %p421 = pneg %p227
        $region54: #{chatglm_forward.1} parent=39 // pred_check_branch
          %423 = sbr.rel (%p421) target = $region56
        $region55: #{chatglm_forward.1} parent=39 // pred_region
          %p424 = scmp.lt.s32.totalorder %s24, 1
          %s425 = scalar_select %p424, %s24, 1
          %s426 = smul.addr %s425, 4
          %s427 = smul.addr %s426, 4
          %s428 = scalar_lea.vmem %s8, %s427
        $region56: #{chatglm_forward.1} parent=39 // pred_fallthru
          _
        // Predicated region
        $region57: #{chatglm_forward.1} parent=39 // pred_check
          %p429 = pneg %p253
        $region58: #{chatglm_forward.1} parent=39 // pred_check_branch
          %431 = sbr.rel (%p429) target = $region60
        $region59: #{chatglm_forward.1} parent=39 // pred_region
          %p432 = scmp.lt.s32.totalorder %s24, 1
          %s433 = scalar_select %p432, %s24, 1
          %s434 = scalar_lea.vmem %s9, %s433
        $region60: #{chatglm_forward.1} parent=39 // pred_fallthru
          _
        // Predicated region
        $region61: #{chatglm_forward.1} parent=39 // pred_check
          %p435 = pneg %p279
        $region62: #{chatglm_forward.1} parent=39 // pred_check_branch
          %437 = sbr.rel (%p435) target = $region64
        $region63: #{chatglm_forward.1} parent=39 // pred_region
          %s438 = sand.u32 %s24, 1
          %s439 = scalar_lea.sflag [#allocation7], %s438
          %s440 = sand.u32 %s269, 1
          %s441 = smul.addr %s440, 64
          %s442 = scalar_lea.vmem [#allocation6], %s441
          %444 = vsyncadd %s439, 0
          %s445 = smul.addr %s24, 16
          %s446 = smul.addr %s445, 4
          %s447 = scalar_lea.hbm %s10, %s446
          %s448 = sshll.u32 %s447, 4
          %s449 = int_to_ptr.hbm [resolvable:$true] %s448
          %s450 = sshll.u32 %s442, 4
          %s451 = int_to_ptr.vmem [resolvable:$true] %s450
          %456 = dma.hbm_to_vmem [thread:$0]  %s449, 1024, %s451, %s439, 64, 64, 4
        $region64: #{chatglm_forward.1} parent=39 // pred_fallthru
          _
        // Predicated region
        $region65: #{chatglm_forward.1} parent=39 // pred_check
          %p457 = pneg %p305
        $region66: #{chatglm_forward.1} parent=39 // pred_check_branch
          %459 = sbr.rel (%p457) target = $region68
        $region67: #{chatglm_forward.1} parent=39 // pred_region
          %s460 = sand.u32 %s24, 1
          %s461 = scalar_lea.sflag [#allocation7], %s460
          %s462 = sand.u32 %s295, 1
          %s463 = smul.addr %s462, 32
          %s464 = scalar_lea.vmem [#allocation8], %s463
          %466 = vsyncadd %s461, 0
          %s467 = smul.addr %s24, 8
          %s468 = smul.addr %s467, 4
          %s469 = scalar_lea.hbm %s11, %s468
          %s470 = sshll.u32 %s469, 4
          %s471 = int_to_ptr.hbm [resolvable:$true] %s470
          %s472 = sshll.u32 %s464, 4
          %s473 = int_to_ptr.vmem [resolvable:$true] %s472
          %478 = dma.hbm_to_vmem [thread:$0]  %s471, 512, %s473, %s461, 64, 64, 4
        $region68: #{chatglm_forward.1} parent=39 // pred_fallthru
          _
      $region40: #{chatglm_forward.1} parent=5 // pred_fallthru
        _
      %p479 = scmp.le.s32.totalorder 1, %s24
      %p480 = scmp.lt.s32.totalorder %s24, 3
      %p481 = pnand %p479, %p480
      %p482 = pneg %p481
      // Predicated region
      $region69: #{chatglm_forward.1} parent=5 // pred_check
        _
      $region70: #{chatglm_forward.1} parent=5 // pred_check_branch
        %484 = sbr.rel (%p481) target = $region72
      $region71: #{chatglm_forward.1} parent=5 // pred_region
        %s485 = ssub.s32 %s24, 1
        // Predicated region
        $region73: #{chatglm_forward.1} parent=71 // pred_check
          %p486 = pneg %p66
        $region74: #{chatglm_forward.1} parent=71 // pred_check_branch
          %488 = sbr.rel (%p486) target = $region76
        $region75: #{chatglm_forward.1} parent=71 // pred_region
          %490 = dma.done [#allocation4], 1024
        $region76: #{chatglm_forward.1} parent=71 // pred_fallthru
          _
        %s491 = sand.u32 %s29, 1
        %s492 = scalar_lea.sflag [#allocation7], %s491
        %s493 = sand.u32 %s272, 1
        %s494 = smul.addr %s493, 64
        %s495 = scalar_lea.vmem [#allocation6], %s494
        // Predicated region
        $region77: #{chatglm_forward.1} parent=71 // pred_check
          %p496 = pneg %p285
        $region78: #{chatglm_forward.1} parent=71 // pred_check_branch
          %498 = sbr.rel (%p496) target = $region80
        $region79: #{chatglm_forward.1} parent=71 // pred_region
          %500 = dma.done %s492, 1024
        $region80: #{chatglm_forward.1} parent=71 // pred_fallthru
          _
        %s501 = sand.u32 %s29, 1
        %s502 = scalar_lea.sflag [#allocation7], %s501
        %s503 = sand.u32 %s298, 1
        %s504 = smul.addr %s503, 32
        %s505 = scalar_lea.vmem [#allocation8], %s504
        // Predicated region
        $region81: #{chatglm_forward.1} parent=71 // pred_check
          %p506 = pneg %p311
        $region82: #{chatglm_forward.1} parent=71 // pred_check_branch
          %508 = sbr.rel (%p506) target = $region84
        $region83: #{chatglm_forward.1} parent=71 // pred_region
          %510 = dma.done %s502, 512
        $region84: #{chatglm_forward.1} parent=71 // pred_fallthru
          _
        %p511 = pneg %p45
        %p512 = pneg %p42
        %p513 = pneg %p66
        %p514 = pneg %p63
        %p515 = pneg %p87
        %p516 = pneg %p84
        %p517 = pneg %p108
        %p518 = pneg %p105
        %p519 = pneg %p129
        %p520 = pneg %p126
        %p521 = scmp.lt.s32.totalorder %s29, 1
        %s522 = scalar_select %p521, %s29, 1
        %s523 = scalar_lea.vmem %s5, %s522
        %p524 = pneg %p155
        %p525 = pneg %p152
        %p526 = scmp.lt.s32.totalorder %s29, 1
        %s527 = scalar_select %p526, %s29, 1
        %s528 = smul.addr %s527, 16
        %s529 = smul.addr %s528, 4
        %s530 = scalar_lea.vmem %s6, %s529
        %p531 = pneg %p181
        %p532 = pneg %p178
        %p533 = scmp.lt.s32.totalorder %s29, 1
        %s534 = scalar_select %p533, %s29, 1
        %s535 = scalar_lea.vmem %s7, %s534
        %p536 = pneg %p207
        %p537 = pneg %p204
        %p538 = scmp.lt.s32.totalorder %s29, 1
        %s539 = scalar_select %p538, %s29, 1
        %s540 = smul.addr %s539, 4
        %s541 = smul.addr %s540, 4
        %s542 = scalar_lea.vmem %s8, %s541
        %p543 = pneg %p233
        %p544 = pneg %p230
        %p545 = scmp.lt.s32.totalorder %s29, 1
        %s546 = scalar_select %p545, %s29, 1
        %s547 = scalar_lea.vmem %s9, %s546
        %p548 = pneg %p259
        %p549 = pneg %p256
        %s550 = sand.u32 %s29, 1
        %s551 = scalar_lea.sflag [#allocation7], %s550
        %s552 = sand.u32 %s272, 1
        %s553 = smul.addr %s552, 64
        %s554 = scalar_lea.vmem [#allocation6], %s553
        %p555 = pneg %p285
        %p556 = pneg %p282
        %s557 = sand.u32 %s29, 1
        %s558 = scalar_lea.sflag [#allocation7], %s557
        %s559 = sand.u32 %s298, 1
        %s560 = smul.addr %s559, 32
        %s561 = scalar_lea.vmem [#allocation8], %s560
        %p562 = pneg %p311
        %p563 = pneg %p308
        %p564 = pneg %p332
        %p565 = pneg %p329
        %p566 = pneg %p353
        %p567 = pneg %p350
        %p568 = scmp.lt.s32.totalorder %s29, 1
        %s569 = scalar_select %p568, %s29, 1
        %s570 = scalar_lea.vmem %s5, %s569
        %p571 = scmp.lt.s32.totalorder %s29, 1
        %s572 = scalar_select %p571, %s29, 1
        %s573 = smul.addr %s572, 16
        %s574 = smul.addr %s573, 4
        %s575 = scalar_lea.vmem %s6, %s574
        %p576 = scmp.lt.s32.totalorder %s29, 1
        %s577 = scalar_select %p576, %s29, 1
        %s578 = scalar_lea.vmem %s7, %s577
        %p579 = scmp.lt.s32.totalorder %s29, 1
        %s580 = scalar_select %p579, %s29, 1
        %s581 = smul.addr %s580, 4
        %s582 = smul.addr %s581, 4
        %s583 = scalar_lea.vmem %s8, %s582
        %p584 = scmp.lt.s32.totalorder %s29, 1
        %s585 = scalar_select %p584, %s29, 1
        %s586 = scalar_lea.vmem %s9, %s585
        %p588 = scmp.eq.s32.totalorder %s29, 0
        // Predicated region
        $region85: #{chatglm_forward.1} parent=71 // pred_check
          %p589 = pneg %p588
        $region86: #{chatglm_forward.1} parent=71 // pred_check_branch
          %591 = sbr.rel (%p589) target = $region88
        $region87: #{chatglm_forward.1} parent=71 // pred_region
          %v592 = vld [vmem:[%s0] sm:$0xff]
          %v593 = vlaneseq
          %v594 = vand.u32 %v593, 127
          %595 = vset.pattern.permute.xlu0 0
          %596 = vperm.xlu0 %595, %v592
          %v597 = vpop.permute.xlu0 %596
          %vm598 = vcmp.eq.s32.totalorder %v594, %v597
          %v599 = vsel %vm598, 1, 0
          %v600 = vcvt.s32.f32 %v599
          %v601 = vpack.c.bf16 %v600, %v600
          %v602 = vld [vmem:[#allocation3] sm:$0xf]
          %v603 = vld [vmem:[#allocation3 + $0x4] sm:$0xf]
          %v604 = vld [vmem:[#allocation3 + $0x8] sm:$0xf]
          %v605 = vld [vmem:[#allocation3 + $0xc] sm:$0xf]
          %v606 = vld [vmem:[#allocation3 + $0x10] sm:$0xf]
          %v607 = vld [vmem:[#allocation3 + $0x14] sm:$0xf]
          %v608 = vld [vmem:[#allocation3 + $0x18] sm:$0xf]
          %v609 = vld [vmem:[#allocation3 + $0x1c] sm:$0xf]
          %v610 = vld [vmem:[#allocation3 + $0x20] sm:$0xf]
          %v611 = vld [vmem:[#allocation3 + $0x24] sm:$0xf]
          %v612 = vld [vmem:[#allocation3 + $0x28] sm:$0xf]
          %v613 = vld [vmem:[#allocation3 + $0x2c] sm:$0xf]
          %v614 = vld [vmem:[#allocation3 + $0x30] sm:$0xf]
          %v615 = vld [vmem:[#allocation3 + $0x34] sm:$0xf]
          %v616 = vld [vmem:[#allocation3 + $0x38] sm:$0xf]
          %v617 = vld [vmem:[#allocation3 + $0x3c] sm:$0xf]
          %v634 = vunpack.c.l.b16 %v602
          %v635 = vunpack.c.l.b16 %v603
          %v636 = vunpack.c.l.b16 %v604
          %v637 = vunpack.c.l.b16 %v605
          %v638 = vunpack.c.l.b16 %v606
          %v639 = vunpack.c.l.b16 %v607
          %v640 = vunpack.c.l.b16 %v608
          %v641 = vunpack.c.l.b16 %v609
          %v642 = vunpack.c.l.b16 %v610
          %v643 = vunpack.c.l.b16 %v611
          %v644 = vunpack.c.l.b16 %v612
          %v645 = vunpack.c.l.b16 %v613
          %v646 = vunpack.c.l.b16 %v614
          %v647 = vunpack.c.l.b16 %v615
          %v648 = vunpack.c.l.b16 %v616
          %v649 = vunpack.c.l.b16 %v617
          %v650 = vpack.c.b16 %v635, %v634
          %v651 = vpack.c.b16 %v637, %v636
          %v652 = vpack.c.b16 %v639, %v638
          %v653 = vpack.c.b16 %v641, %v640
          %v654 = vpack.c.b16 %v643, %v642
          %v655 = vpack.c.b16 %v645, %v644
          %v656 = vpack.c.b16 %v647, %v646
          %v657 = vpack.c.b16 %v649, %v648
          %666 = vmatpush.bf16.msra.mxu0 %v657
          %667 = vmatpush.bf16.msra.mxu0 %v656
          %668 = vmatpush.bf16.msra.mxu0 %v655
          %669 = vmatpush.bf16.msra.mxu0 %v654
          %670 = vmatpush.bf16.msra.mxu0 %v653
          %671 = vmatpush.bf16.msra.mxu0 %v652
          %672 = vmatpush.bf16.msra.mxu0 %v651
          %673 = vmatpush.bf16.msra.mxu0 %v650
          %674 = vmatmul.bf16.gmra.mxu0 %v601
          %v675 = vpop.f32.mrf.mxu0
          %v676 = vadd.f32 0.0, %v675
          %v677 = vpop.f32.mrf.mxu0
          %678 = vdwg.mxu0
          %679 = vst [vmem:[#allocation2] sm:$0xff] %v676
        $region88: #{chatglm_forward.1} parent=71 // pred_fallthru
          _
        %v680 = vld [vmem:[#allocation2] sm:$0xff]
        %v681 = vld [vmem:[%s570] sm:$0x1]
        %v682 = vmul.f32 %v680, %v680
        %683 = vadd.xlane.f32.xlu0 %v682
        %v684 = vpop.xlane.xlu0 %683
        %v685 = vmul.f32 %v684, 0.03125
        %v686 = vadd.f32 %v685, 1e-05
        %v687 = vrsqrt.pop %v686
        %v688 = vmul.f32 %v687, %v686
        %v689 = vmul.f32 %v688, %v687
        %v690 = vmul.f32 0.5, %v689
        %v691 = vsub.f32 1.5, %v690
        %v692 = vmul.f32 %v687, %v691
        %vm693 = vweird.f32 %v686
        %vm694 = vweird.f32 %v687
        %vm695 = vmor %vm693, %vm694
        %v696 = vsel %vm695, %v687, %v692
        %v697 = vmul.f32 %v680, %v696
        %v699 = vperm.slane %v681, 0
        %v701 = vmul.f32 %v697, %v699
        %v702 = vpack.c.bf16 %v701, %v701
        %v703 = vld [vmem:[%s575] sm:$0xf]
        %v704 = vld [vmem:[%s575 + $0x4] sm:$0xf]
        %v705 = vld [vmem:[%s575 + $0x8] sm:$0xf]
        %v706 = vld [vmem:[%s575 + $0xc] sm:$0xf]
        %v707 = vld [vmem:[%s575 + $0x10] sm:$0xf]
        %v708 = vld [vmem:[%s575 + $0x14] sm:$0xf]
        %v709 = vld [vmem:[%s575 + $0x18] sm:$0xf]
        %v710 = vld [vmem:[%s575 + $0x1c] sm:$0xf]
        %v711 = vld [vmem:[%s575 + $0x20] sm:$0xf]
        %v712 = vld [vmem:[%s575 + $0x24] sm:$0xf]
        %v713 = vld [vmem:[%s575 + $0x28] sm:$0xf]
        %v714 = vld [vmem:[%s575 + $0x2c] sm:$0xf]
        %v715 = vld [vmem:[%s575 + $0x30] sm:$0xf]
        %v716 = vld [vmem:[%s575 + $0x34] sm:$0xf]
        %v717 = vld [vmem:[%s575 + $0x38] sm:$0xf]
        %v718 = vld [vmem:[%s575 + $0x3c] sm:$0xf]
        %v719 = vld [vmem:[%s578] sm:$0x1]
        %v721 = vperm.slane %v719, 0
        %v739 = vunpack.c.l.b16 %v703
        %v740 = vunpack.c.l.b16 %v704
        %v741 = vunpack.c.l.b16 %v705
        %v742 = vunpack.c.l.b16 %v706
        %v743 = vunpack.c.l.b16 %v707
        %v744 = vunpack.c.l.b16 %v708
        %v745 = vunpack.c.l.b16 %v709
        %v746 = vunpack.c.l.b16 %v710
        %v747 = vunpack.c.l.b16 %v711
        %v748 = vunpack.c.l.b16 %v712
        %v749 = vunpack.c.l.b16 %v713
        %v750 = vunpack.c.l.b16 %v714
        %v751 = vunpack.c.l.b16 %v715
        %v752 = vunpack.c.l.b16 %v716
        %v753 = vunpack.c.l.b16 %v717
        %v754 = vunpack.c.l.b16 %v718
        %v755 = vpack.c.b16 %v740, %v739
        %v756 = vpack.c.b16 %v742, %v741
        %v757 = vpack.c.b16 %v744, %v743
        %v758 = vpack.c.b16 %v746, %v745
        %v759 = vpack.c.b16 %v748, %v747
        %v760 = vpack.c.b16 %v750, %v749
        %v761 = vpack.c.b16 %v752, %v751
        %v762 = vpack.c.b16 %v754, %v753
        %771 = vmatpush.bf16.msra.mxu0 %v762
        %772 = vmatpush.bf16.msra.mxu0 %v761
        %773 = vmatpush.bf16.msra.mxu0 %v760
        %774 = vmatpush.bf16.msra.mxu0 %v759
        %775 = vmatpush.bf16.msra.mxu0 %v758
        %776 = vmatpush.bf16.msra.mxu0 %v757
        %777 = vmatpush.bf16.msra.mxu0 %v756
        %778 = vmatpush.bf16.msra.mxu0 %v755
        %779 = vmatmul.bf16.gmra.mxu0 %v702
        %v780 = vpop.f32.mrf.mxu0
        %v781 = vadd.f32 %v721, %v780
        %v782 = vpop.f32.mrf.mxu0
        %783 = vdwg.mxu0
        %v784 = vld [vmem:[%s4] sm:$0xff]
        %v785 = vld [vmem:[%s4 + $0x8] sm:$0xff]
        %v786 = vld [vmem:[%s4 + $0x10] sm:$0xff]
        %v787 = vld [vmem:[%s4 + $0x18] sm:$0xff]
        %v788 = vld [vmem:[%s4 + $0x20] sm:$0xff]
        %v789 = vld [vmem:[%s4 + $0x28] sm:$0xff]
        %v790 = vld [vmem:[%s4 + $0x30] sm:$0xff]
        %v791 = vld [vmem:[%s4 + $0x38] sm:$0xff]
        %v792 = vld [vmem:[%s4 + $0x40] sm:$0xff]
        %v793 = vld [vmem:[%s4 + $0x48] sm:$0xff]
        %v794 = vld [vmem:[%s4 + $0x50] sm:$0xff]
        %v795 = vld [vmem:[%s4 + $0x58] sm:$0xff]
        %v796 = vld [vmem:[%s4 + $0x60] sm:$0xff]
        %v797 = vld [vmem:[%s4 + $0x68] sm:$0xff]
        %v798 = vld [vmem:[%s4 + $0x70] sm:$0xff]
        %v799 = vld [vmem:[%s4 + $0x78] sm:$0xff]
        %800 = vmatpush.msra.mxu0 %v799
        %801 = vmatpush.msra.mxu0 %v798
        %802 = vmatpush.msra.mxu0 %v797
        %803 = vmatpush.msra.mxu0 %v796
        %804 = vmatpush.msra.mxu0 %v795
        %805 = vmatpush.msra.mxu0 %v794
        %806 = vmatpush.msra.mxu0 %v793
        %807 = vmatpush.msra.mxu0 %v792
        %808 = vmatpush.msra.mxu0 %v791
        %809 = vmatpush.msra.mxu0 %v790
        %810 = vmatpush.msra.mxu0 %v789
        %811 = vmatpush.msra.mxu0 %v788
        %812 = vmatpush.msra.mxu0 %v787
        %813 = vmatpush.msra.mxu0 %v786
        %814 = vmatpush.msra.mxu0 %v785
        %815 = vmatpush.msra.mxu0 %v784
        %816 = vmatmul.f32.gmra.mxu0 %v781
        %v817 = vpop.f32.mrf.mxu0
        %v818 = vadd.f32 0.0, %v817
        %819 = vdwg.mxu0
        %v820 = vld [vmem:[%s2] sm:$0xff]
        %v821 = vmul.f32 %v781, %v820
        %v822 = vld [vmem:[%s3] sm:$0xff]
        %v823 = vmul.f32 %v818, %v822
        %v824 = vadd.f32 %v821, %v823
        %826 = vrot.lane.b32.xlu0 %v824, 120
        %v827 = vpop.permute.xlu0 %826
        %828 = vrot.lane.b32.xlu0 %v824, 112
        %v829 = vpop.permute.xlu0 %828
        %830 = vrot.lane.b32.xlu0 %v824, 104
        %v831 = vpop.permute.xlu0 %830
        %832 = vrot.lane.b32.xlu0 %v824, 96
        %v833 = vpop.permute.xlu0 %832
        %vm834 = vcmask 64512
        %v835 = vsel %vm834, %v824, 0
        %v837 = vsel %vm834, %v833, 0
        %839 = vmatpush.xpose.msra.mxu0 0.0
        %840 = vmatpush.xpose.msra.mxu0 0.0
        %841 = vmatpush.xpose.msra.mxu0 0.0
        %842 = vmatpush.xpose.msra.mxu0 0.0
        %843 = vmatpush.xpose.msra.mxu0 0.0
        %844 = vmatpush.xpose.msra.mxu0 0.0
        %845 = vmatpush.xpose.msra.mxu0 0.0
        %846 = vmatpush.xpose.msra.mxu0 0.0
        %847 = vmatpush.xpose.msra.mxu0 0.0
        %848 = vmatpush.xpose.msra.mxu0 0.0
        %849 = vmatpush.xpose.msra.mxu0 0.0
        %850 = vmatpush.xpose.msra.mxu0 0.0
        %851 = vmatpush.xpose.msra.mxu0 0.0
        %852 = vmatpush.xpose.msra.mxu0 0.0
        %853 = vmatpush.xpose.msra.mxu0 0.0
        %854 = vmatpush.xpose.msra.mxu0 %v837
        %855 = vmatmul.f32.gmra.mxu0 %v835
        %v856 = vpop.f32.mrf.mxu0
        %v857 = vadd.f32 0.0, %v856
        %858 = vdwg.mxu0
        %859 = vrot.lane.b32.xlu0 %v827, 96
        %v860 = vpop.permute.xlu0 %859
        %v861 = vsel %vm834, %v827, 0
        %v863 = vsel %vm834, %v860, 0
        %865 = vmatpush.xpose.msra.mxu0 0.0
        %866 = vmatpush.xpose.msra.mxu0 0.0
        %867 = vmatpush.xpose.msra.mxu0 0.0
        %868 = vmatpush.xpose.msra.mxu0 0.0
        %869 = vmatpush.xpose.msra.mxu0 0.0
        %870 = vmatpush.xpose.msra.mxu0 0.0
        %871 = vmatpush.xpose.msra.mxu0 0.0
        %872 = vmatpush.xpose.msra.mxu0 0.0
        %873 = vmatpush.xpose.msra.mxu0 0.0
        %874 = vmatpush.xpose.msra.mxu0 0.0
        %875 = vmatpush.xpose.msra.mxu0 0.0
        %876 = vmatpush.xpose.msra.mxu0 0.0
        %877 = vmatpush.xpose.msra.mxu0 0.0
        %878 = vmatpush.xpose.msra.mxu0 0.0
        %879 = vmatpush.xpose.msra.mxu0 0.0
        %880 = vmatpush.xpose.msra.mxu0 %v863
        %881 = vmatmul.f32.gmra.mxu0 %v861
        %v882 = vpop.f32.mrf.mxu0
        %v883 = vadd.f32 0.0, %v882
        %884 = vdwg.mxu0
        %885 = vrot.lane.b32.xlu0 %v829, 96
        %v886 = vpop.permute.xlu0 %885
        %v887 = vsel %vm834, %v829, 0
        %v889 = vsel %vm834, %v886, 0
        %891 = vmatpush.xpose.msra.mxu0 0.0
        %892 = vmatpush.xpose.msra.mxu0 0.0
        %893 = vmatpush.xpose.msra.mxu0 0.0
        %894 = vmatpush.xpose.msra.mxu0 0.0
        %895 = vmatpush.xpose.msra.mxu0 0.0
        %896 = vmatpush.xpose.msra.mxu0 0.0
        %897 = vmatpush.xpose.msra.mxu0 0.0
        %898 = vmatpush.xpose.msra.mxu0 0.0
        %899 = vmatpush.xpose.msra.mxu0 0.0
        %900 = vmatpush.xpose.msra.mxu0 0.0
        %901 = vmatpush.xpose.msra.mxu0 0.0
        %902 = vmatpush.xpose.msra.mxu0 0.0
        %903 = vmatpush.xpose.msra.mxu0 0.0
        %904 = vmatpush.xpose.msra.mxu0 0.0
        %905 = vmatpush.xpose.msra.mxu0 0.0
        %906 = vmatpush.xpose.msra.mxu0 %v889
        %907 = vmatmul.f32.gmra.mxu0 %v887
        %v908 = vpop.f32.mrf.mxu0
        %v909 = vadd.f32 0.0, %v908
        %910 = vdwg.mxu0
        %911 = vrot.lane.b32.xlu0 %v831, 96
        %v912 = vpop.permute.xlu0 %911
        %v913 = vsel %vm834, %v831, 0
        %v915 = vsel %vm834, %v912, 0
        %917 = vmatpush.xpose.msra.mxu0 0.0
        %918 = vmatpush.xpose.msra.mxu0 0.0
        %919 = vmatpush.xpose.msra.mxu0 0.0
        %920 = vmatpush.xpose.msra.mxu0 0.0
        %921 = vmatpush.xpose.msra.mxu0 0.0
        %922 = vmatpush.xpose.msra.mxu0 0.0
        %923 = vmatpush.xpose.msra.mxu0 0.0
        %924 = vmatpush.xpose.msra.mxu0 0.0
        %925 = vmatpush.xpose.msra.mxu0 0.0
        %926 = vmatpush.xpose.msra.mxu0 0.0
        %927 = vmatpush.xpose.msra.mxu0 0.0
        %928 = vmatpush.xpose.msra.mxu0 0.0
        %929 = vmatpush.xpose.msra.mxu0 0.0
        %930 = vmatpush.xpose.msra.mxu0 0.0
        %931 = vmatpush.xpose.msra.mxu0 0.0
        %932 = vmatpush.xpose.msra.mxu0 %v915
        %933 = vmatmul.f32.gmra.mxu0 %v913
        %v934 = vpop.f32.mrf.mxu0
        %v935 = vadd.f32 0.0, %v934
        %936 = vdwg.mxu0
        %v937 = vmul.f32 %v857, 0.35355338
        %v938 = vmul.f32 %v883, 0.35355338
        %v939 = vmul.f32 %v909, 0.35355338
        %v940 = vmul.f32 %v935, 0.35355338
        %v941 = vlaneseq
        %v942 = vshrl.u32 %v941, 7
        %v943 = vlaneseq
        %v944 = vand.u32 %v943, 127
        %vm945 = vcmp.le.s32.totalorder %v944, %v942
        %v946 = vsel %vm945, %v937, -inf
        %v947 = vsel %vm945, %v938, -inf
        %v948 = vsel %vm945, %v939, -inf
        %v949 = vsel %vm945, %v940, -inf
        %v950 = vsel %vm834, %v946, -inf
        %951 = vmax.xlane.f32.xlu0 %v950
        %v952 = vpop.xlane.xlu0 %951
        %v953 = vsel %vm834, %v947, -inf
        %954 = vmax.xlane.f32.xlu0 %v953
        %v955 = vpop.xlane.xlu0 %954
        %v956 = vsel %vm834, %v948, -inf
        %957 = vmax.xlane.f32.xlu0 %v956
        %v958 = vpop.xlane.xlu0 %957
        %v959 = vsel %vm834, %v949, -inf
        %960 = vmax.xlane.f32.xlu0 %v959
        %v961 = vpop.xlane.xlu0 %960
        %v962 = vsub.f32 %v946, %v952
        %v963 = vsub.f32 %v947, %v955
        %v964 = vsub.f32 %v948, %v958
        %v965 = vsub.f32 %v949, %v961
        %v966 = vmul.f32 %v962, 1.442695
        %v967 = vpow.pop %v966
        %v968 = vmul.f32 %v963, 1.442695
        %v969 = vpow.pop %v968
        %v970 = vmul.f32 %v964, 1.442695
        %v971 = vpow.pop %v970
        %v972 = vmul.f32 %v965, 1.442695
        %v973 = vpow.pop %v972
        %v974 = vsel %vm834, %v967, 0.0
        %975 = vadd.xlane.f32.xlu0 %v974
        %v976 = vpop.xlane.xlu0 %975
        %v977 = vsel %vm834, %v969, 0.0
        %978 = vadd.xlane.f32.xlu0 %v977
        %v979 = vpop.xlane.xlu0 %978
        %v980 = vsel %vm834, %v971, 0.0
        %981 = vadd.xlane.f32.xlu0 %v980
        %v982 = vpop.xlane.xlu0 %981
        %v983 = vsel %vm834, %v973, 0.0
        %984 = vadd.xlane.f32.xlu0 %v983
        %v985 = vpop.xlane.xlu0 %984
        %v986 = vrcp.pop %v976
        %v987 = vmul.f32 %v976, %v986
        %v988 = vsub.f32 1.0, %v987
        %v989 = vmul.f32 %v986, %v988
        %v990 = vadd.f32 %v986, %v989
        %vm991 = vweird.f32 %v976
        %vm992 = vweird.f32 %v986
        %vm993 = vmor %vm991, %vm992
        %v994 = vsel %vm993, %v986, %v990
        %v995 = vand.u32 2147483647, %v976
        %vm996 = vcmp.eq.f32.partialorder %v995, 8.507059e+37
        %v997 = vand.u32 %v976, 2147483648
        %v998 = vor.u32 1.1754944e-38, %v997
        %v999 = vsel %vm996, %v998, %v994
        %v1000 = vmul.f32 %v967, %v999
        %v1001 = vrcp.pop %v979
        %v1002 = vmul.f32 %v979, %v1001
        %v1003 = vsub.f32 1.0, %v1002
        %v1004 = vmul.f32 %v1001, %v1003
        %v1005 = vadd.f32 %v1001, %v1004
        %vm1006 = vweird.f32 %v979
        %vm1007 = vweird.f32 %v1001
        %vm1008 = vmor %vm1006, %vm1007
        %v1009 = vsel %vm1008, %v1001, %v1005
        %v1010 = vand.u32 2147483647, %v979
        %vm1011 = vcmp.eq.f32.partialorder %v1010, 8.507059e+37
        %v1012 = vand.u32 %v979, 2147483648
        %v1013 = vor.u32 1.1754944e-38, %v1012
        %v1014 = vsel %vm1011, %v1013, %v1009
        %v1015 = vmul.f32 %v969, %v1014
        %v1016 = vrcp.pop %v982
        %v1017 = vmul.f32 %v982, %v1016
        %v1018 = vsub.f32 1.0, %v1017
        %v1019 = vmul.f32 %v1016, %v1018
        %v1020 = vadd.f32 %v1016, %v1019
        %vm1021 = vweird.f32 %v982
        %vm1022 = vweird.f32 %v1016
        %vm1023 = vmor %vm1021, %vm1022
        %v1024 = vsel %vm1023, %v1016, %v1020
        %v1025 = vand.u32 2147483647, %v982
        %vm1026 = vcmp.eq.f32.partialorder %v1025, 8.507059e+37
        %v1027 = vand.u32 %v982, 2147483648
        %v1028 = vor.u32 1.1754944e-38, %v1027
        %v1029 = vsel %vm1026, %v1028, %v1024
        %v1030 = vmul.f32 %v971, %v1029
        %v1031 = vrcp.pop %v985
        %v1032 = vmul.f32 %v985, %v1031
        %v1033 = vsub.f32 1.0, %v1032
        %v1034 = vmul.f32 %v1031, %v1033
        %v1035 = vadd.f32 %v1031, %v1034
        %vm1036 = vweird.f32 %v985
        %vm1037 = vweird.f32 %v1031
        %vm1038 = vmor %vm1036, %vm1037
        %v1039 = vsel %vm1038, %v1031, %v1035
        %v1040 = vand.u32 2147483647, %v985
        %vm1041 = vcmp.eq.f32.partialorder %v1040, 8.507059e+37
        %v1042 = vand.u32 %v985, 2147483648
        %v1043 = vor.u32 1.1754944e-38, %v1042
        %v1044 = vsel %vm1041, %v1043, %v1039
        %v1045 = vmul.f32 %v973, %v1044
        %1046 = vrot.lane.b32.xlu0 %v824, 64
        %v1047 = vpop.permute.xlu0 %1046
        %v1050 = vsel %vm834, %v1000, 0
        %1052 = vmatpush.msra.mxu0 0.0
        %1053 = vmatpush.msra.mxu0 0.0
        %1054 = vmatpush.msra.mxu0 0.0
        %1055 = vmatpush.msra.mxu0 0.0
        %1056 = vmatpush.msra.mxu0 0.0
        %1057 = vmatpush.msra.mxu0 0.0
        %1058 = vmatpush.msra.mxu0 0.0
        %1059 = vmatpush.msra.mxu0 0.0
        %1060 = vmatpush.msra.mxu0 0.0
        %1061 = vmatpush.msra.mxu0 0.0
        %1062 = vmatpush.msra.mxu0 0.0
        %1063 = vmatpush.msra.mxu0 0.0
        %1064 = vmatpush.msra.mxu0 0.0
        %1065 = vmatpush.msra.mxu0 0.0
        %1066 = vmatpush.msra.mxu0 0.0
        %1067 = vmatpush.msra.mxu0 %v1047
        %1068 = vmatmul.f32.gmra.mxu0 %v1050
        %v1069 = vpop.f32.mrf.mxu0
        %v1070 = vadd.f32 0.0, %v1069
        %1071 = vdwg.mxu0
        %1072 = vrot.lane.b32.xlu0 %v827, 64
        %v1073 = vpop.permute.xlu0 %1072
        %v1076 = vsel %vm834, %v1015, 0
        %1078 = vmatpush.msra.mxu0 0.0
        %1079 = vmatpush.msra.mxu0 0.0
        %1080 = vmatpush.msra.mxu0 0.0
        %1081 = vmatpush.msra.mxu0 0.0
        %1082 = vmatpush.msra.mxu0 0.0
        %1083 = vmatpush.msra.mxu0 0.0
        %1084 = vmatpush.msra.mxu0 0.0
        %1085 = vmatpush.msra.mxu0 0.0
        %1086 = vmatpush.msra.mxu0 0.0
        %1087 = vmatpush.msra.mxu0 0.0
        %1088 = vmatpush.msra.mxu0 0.0
        %1089 = vmatpush.msra.mxu0 0.0
        %1090 = vmatpush.msra.mxu0 0.0
        %1091 = vmatpush.msra.mxu0 0.0
        %1092 = vmatpush.msra.mxu0 0.0
        %1093 = vmatpush.msra.mxu0 %v1073
        %1094 = vmatmul.f32.gmra.mxu0 %v1076
        %v1095 = vpop.f32.mrf.mxu0
        %v1096 = vadd.f32 0.0, %v1095
        %1097 = vdwg.mxu0
        %1098 = vrot.lane.b32.xlu0 %v829, 64
        %v1099 = vpop.permute.xlu0 %1098
        %v1102 = vsel %vm834, %v1030, 0
        %1104 = vmatpush.msra.mxu0 0.0
        %1105 = vmatpush.msra.mxu0 0.0
        %1106 = vmatpush.msra.mxu0 0.0
        %1107 = vmatpush.msra.mxu0 0.0
        %1108 = vmatpush.msra.mxu0 0.0
        %1109 = vmatpush.msra.mxu0 0.0
        %1110 = vmatpush.msra.mxu0 0.0
        %1111 = vmatpush.msra.mxu0 0.0
        %1112 = vmatpush.msra.mxu0 0.0
        %1113 = vmatpush.msra.mxu0 0.0
        %1114 = vmatpush.msra.mxu0 0.0
        %1115 = vmatpush.msra.mxu0 0.0
        %1116 = vmatpush.msra.mxu0 0.0
        %1117 = vmatpush.msra.mxu0 0.0
        %1118 = vmatpush.msra.mxu0 0.0
        %1119 = vmatpush.msra.mxu0 %v1099
        %1120 = vmatmul.f32.gmra.mxu0 %v1102
        %v1121 = vpop.f32.mrf.mxu0
        %v1122 = vadd.f32 0.0, %v1121
        %1123 = vdwg.mxu0
        %1124 = vrot.lane.b32.xlu0 %v831, 64
        %v1125 = vpop.permute.xlu0 %1124
        %v1128 = vsel %vm834, %v1045, 0
        %1130 = vmatpush.msra.mxu0 0.0
        %1131 = vmatpush.msra.mxu0 0.0
        %1132 = vmatpush.msra.mxu0 0.0
        %1133 = vmatpush.msra.mxu0 0.0
        %1134 = vmatpush.msra.mxu0 0.0
        %1135 = vmatpush.msra.mxu0 0.0
        %1136 = vmatpush.msra.mxu0 0.0
        %1137 = vmatpush.msra.mxu0 0.0
        %1138 = vmatpush.msra.mxu0 0.0
        %1139 = vmatpush.msra.mxu0 0.0
        %1140 = vmatpush.msra.mxu0 0.0
        %1141 = vmatpush.msra.mxu0 0.0
        %1142 = vmatpush.msra.mxu0 0.0
        %1143 = vmatpush.msra.mxu0 0.0
        %1144 = vmatpush.msra.mxu0 0.0
        %1145 = vmatpush.msra.mxu0 %v1125
        %1146 = vmatmul.f32.gmra.mxu0 %v1128
        %v1147 = vpop.f32.mrf.mxu0
        %v1148 = vadd.f32 0.0, %v1147
        %1149 = vdwg.mxu0
        %1151 = vrot.lane.b32.xlu0 %v1096, 8
        %v1152 = vpop.permute.xlu0 %1151
        %1155 = vrot.lane.b32.xlu0 %v1122, 16
        %v1156 = vpop.permute.xlu0 %1155
        %1159 = vrot.lane.b32.xlu0 %v1148, 24
        %v1160 = vpop.permute.xlu0 %1159
        %v1162 = vsel %vm834, %v1070, %v1152
        %vm1163 = vcmask 130048
        %v1164 = vsel %vm1163, %v1162, %v1156
        %vm1165 = vcmask 195584
        %v1166 = vsel %vm1165, %v1164, %v1160
        %v1167 = vpack.c.bf16 %v1166, %v1166
        %v1168 = vld [vmem:[%s583] sm:$0xf]
        %v1169 = vld [vmem:[%s583 + $0x4] sm:$0xf]
        %v1170 = vld [vmem:[%s583 + $0x8] sm:$0xf]
        %v1171 = vld [vmem:[%s583 + $0xc] sm:$0xf]
        %v1176 = vunpack.c.l.b16 %v1168
        %v1177 = vunpack.c.l.b16 %v1169
        %v1178 = vunpack.c.l.b16 %v1170
        %v1179 = vunpack.c.l.b16 %v1171
        %v1180 = vpack.c.b16 %v1177, %v1176
        %v1181 = vpack.c.b16 %v1179, %v1178
        %vm1184 = vcmask 261120
        %v1186 = vsel %vm1184, %v1167, 0
        %1188 = vmatpush.bf16.msra.mxu0 0
        %1189 = vmatpush.bf16.msra.mxu0 0
        %1190 = vmatpush.bf16.msra.mxu0 0
        %1191 = vmatpush.bf16.msra.mxu0 0
        %1192 = vmatpush.bf16.msra.mxu0 0
        %1193 = vmatpush.bf16.msra.mxu0 0
        %1194 = vmatpush.bf16.msra.mxu0 %v1181
        %1195 = vmatpush.bf16.msra.mxu0 %v1180
        %1196 = vmatmul.bf16.gmra.mxu0 %v1186
        %v1197 = vpop.f32.mrf.mxu0
        %v1198 = vadd.f32 0.0, %v1197
        %v1199 = vpop.f32.mrf.mxu0
        %1200 = vdwg.mxu0
        %v1201 = vadd.f32 %v680, %v1198
        %v1202 = vld [vmem:[%s586] sm:$0x1]
        %v1203 = vmul.f32 %v1201, %v1201
        %1204 = vadd.xlane.f32.xlu0 %v1203
        %v1205 = vpop.xlane.xlu0 %1204
        %v1206 = vmul.f32 %v1205, 0.03125
        %v1207 = vadd.f32 %v1206, 1e-05
        %v1208 = vrsqrt.pop %v1207
        %v1209 = vmul.f32 %v1208, %v1207
        %v1210 = vmul.f32 %v1209, %v1208
        %v1211 = vmul.f32 0.5, %v1210
        %v1212 = vsub.f32 1.5, %v1211
        %v1213 = vmul.f32 %v1208, %v1212
        %vm1214 = vweird.f32 %v1207
        %vm1215 = vweird.f32 %v1208
        %vm1216 = vmor %vm1214, %vm1215
        %v1217 = vsel %vm1216, %v1208, %v1213
        %v1218 = vmul.f32 %v1201, %v1217
        %v1220 = vperm.slane %v1202, 0
        %v1222 = vmul.f32 %v1218, %v1220
        %v1223 = vpack.c.bf16 %v1222, %v1222
        %v1224 = vld [vmem:[%s495] sm:$0xf]
        %v1225 = vld [vmem:[%s495 + $0x4] sm:$0xf]
        %v1226 = vld [vmem:[%s495 + $0x8] sm:$0xf]
        %v1227 = vld [vmem:[%s495 + $0xc] sm:$0xf]
        %v1228 = vld [vmem:[%s495 + $0x10] sm:$0xf]
        %v1229 = vld [vmem:[%s495 + $0x14] sm:$0xf]
        %v1230 = vld [vmem:[%s495 + $0x18] sm:$0xf]
        %v1231 = vld [vmem:[%s495 + $0x1c] sm:$0xf]
        %v1232 = vld [vmem:[%s495 + $0x20] sm:$0xf]
        %v1233 = vld [vmem:[%s495 + $0x24] sm:$0xf]
        %v1234 = vld [vmem:[%s495 + $0x28] sm:$0xf]
        %v1235 = vld [vmem:[%s495 + $0x2c] sm:$0xf]
        %v1236 = vld [vmem:[%s495 + $0x30] sm:$0xf]
        %v1237 = vld [vmem:[%s495 + $0x34] sm:$0xf]
        %v1238 = vld [vmem:[%s495 + $0x38] sm:$0xf]
        %v1239 = vld [vmem:[%s495 + $0x3c] sm:$0xf]
        %v1256 = vunpack.c.l.b16 %v1224
        %v1257 = vunpack.c.l.b16 %v1225
        %v1258 = vunpack.c.l.b16 %v1226
        %v1259 = vunpack.c.l.b16 %v1227
        %v1260 = vunpack.c.l.b16 %v1228
        %v1261 = vunpack.c.l.b16 %v1229
        %v1262 = vunpack.c.l.b16 %v1230
        %v1263 = vunpack.c.l.b16 %v1231
        %v1264 = vunpack.c.l.b16 %v1232
        %v1265 = vunpack.c.l.b16 %v1233
        %v1266 = vunpack.c.l.b16 %v1234
        %v1267 = vunpack.c.l.b16 %v1235
        %v1268 = vunpack.c.l.b16 %v1236
        %v1269 = vunpack.c.l.b16 %v1237
        %v1270 = vunpack.c.l.b16 %v1238
        %v1271 = vunpack.c.l.b16 %v1239
        %v1272 = vpack.c.b16 %v1257, %v1256
        %v1273 = vpack.c.b16 %v1259, %v1258
        %v1274 = vpack.c.b16 %v1261, %v1260
        %v1275 = vpack.c.b16 %v1263, %v1262
        %v1276 = vpack.c.b16 %v1265, %v1264
        %v1277 = vpack.c.b16 %v1267, %v1266
        %v1278 = vpack.c.b16 %v1269, %v1268
        %v1279 = vpack.c.b16 %v1271, %v1270
        %1288 = vmatpush.bf16.msra.mxu0 %v1279
        %1289 = vmatpush.bf16.msra.mxu0 %v1278
        %1290 = vmatpush.bf16.msra.mxu0 %v1277
        %1291 = vmatpush.bf16.msra.mxu0 %v1276
        %1292 = vmatpush.bf16.msra.mxu0 %v1275
        %1293 = vmatpush.bf16.msra.mxu0 %v1274
        %1294 = vmatpush.bf16.msra.mxu0 %v1273
        %1295 = vmatpush.bf16.msra.mxu0 %v1272
        %1296 = vmatmul.bf16.gmra.mxu0 %v1223
        %v1297 = vpop.f32.mrf.mxu0
        %v1298 = vadd.f32 0.0, %v1297
        %v1299 = vpop.f32.mrf.mxu0
        %1300 = vdwg.mxu0
        %v1301 = vxor.u32 %v1298, 2147483648
        %v1302 = vmul.f32 %v1301, 1.442695
        %v1303 = vpow.pop %v1302
        %v1304 = vadd.f32 %v1303, 1.0
        %v1305 = vrcp.pop %v1304
        %v1306 = vmul.f32 %v1304, %v1305
        %v1307 = vsub.f32 1.0, %v1306
        %v1308 = vmul.f32 %v1305, %v1307
        %v1309 = vadd.f32 %v1305, %v1308
        %vm1310 = vweird.f32 %v1304
        %vm1311 = vweird.f32 %v1305
        %vm1312 = vmor %vm1310, %vm1311
        %v1313 = vsel %vm1312, %v1305, %v1309
        %v1314 = vand.u32 2147483647, %v1304
        %vm1315 = vcmp.eq.f32.partialorder %v1314, 8.507059e+37
        %v1316 = vand.u32 %v1304, 2147483648
        %v1317 = vor.u32 1.1754944e-38, %v1316
        %v1318 = vsel %vm1315, %v1317, %v1313
        %v1319 = vmul.f32 1.0, %v1318
        %v1320 = vmul.f32 %v1298, %v1319
        %1322 = vrot.lane.b32.xlu0 %v1298, 64
        %v1323 = vpop.permute.xlu0 %1322
        %v1325 = vmul.f32 %v1320, %v1323
        %v1326 = vpack.c.bf16 %v1325, %v1325
        %v1327 = vld [vmem:[%s505] sm:$0xf]
        %v1328 = vld [vmem:[%s505 + $0x4] sm:$0xf]
        %v1329 = vld [vmem:[%s505 + $0x8] sm:$0xf]
        %v1330 = vld [vmem:[%s505 + $0xc] sm:$0xf]
        %v1331 = vld [vmem:[%s505 + $0x10] sm:$0xf]
        %v1332 = vld [vmem:[%s505 + $0x14] sm:$0xf]
        %v1333 = vld [vmem:[%s505 + $0x18] sm:$0xf]
        %v1334 = vld [vmem:[%s505 + $0x1c] sm:$0xf]
        %v1343 = vunpack.c.l.b16 %v1327
        %v1344 = vunpack.c.l.b16 %v1328
        %v1345 = vunpack.c.l.b16 %v1329
        %v1346 = vunpack.c.l.b16 %v1330
        %v1347 = vunpack.c.l.b16 %v1331
        %v1348 = vunpack.c.l.b16 %v1332
        %v1349 = vunpack.c.l.b16 %v1333
        %v1350 = vunpack.c.l.b16 %v1334
        %v1351 = vpack.c.b16 %v1344, %v1343
        %v1352 = vpack.c.b16 %v1346, %v1345
        %v1353 = vpack.c.b16 %v1348, %v1347
        %v1354 = vpack.c.b16 %v1350, %v1349
        %vm1359 = vcmask 523264
        %v1361 = vsel %vm1359, %v1326, 0
        %1363 = vmatpush.bf16.msra.mxu0 0
        %1364 = vmatpush.bf16.msra.mxu0 0
        %1365 = vmatpush.bf16.msra.mxu0 0
        %1366 = vmatpush.bf16.msra.mxu0 0
        %1367 = vmatpush.bf16.msra.mxu0 %v1354
        %1368 = vmatpush.bf16.msra.mxu0 %v1353
        %1369 = vmatpush.bf16.msra.mxu0 %v1352
        %1370 = vmatpush.bf16.msra.mxu0 %v1351
        %1371 = vmatmul.bf16.gmra.mxu0 %v1361
        %v1372 = vpop.f32.mrf.mxu0
        %v1373 = vadd.f32 0.0, %v1372
        %v1374 = vpop.f32.mrf.mxu0
        %1375 = vdwg.mxu0
        %v1376 = vadd.f32 %v1201, %v1373
        %1377 = vst [vmem:[#allocation2] sm:$0xff] %v1376
        %p1378 = scmp.eq.s32.totalorder %s29, 1
        // Predicated region
        $region89: #{chatglm_forward.1} parent=71 // pred_check
          %p1379 = pneg %p1378
        $region90: #{chatglm_forward.1} parent=71 // pred_check_branch
          %1381 = sbr.rel (%p1379) target = $region92
        $region91: #{chatglm_forward.1} parent=71 // pred_region
          %v1382 = vld [vmem:[%s12] sm:$0x1]
          %v1383 = vmul.f32 %v1376, %v1376
          %1384 = vadd.xlane.f32.xlu0 %v1383
          %v1385 = vpop.xlane.xlu0 %1384
          %v1386 = vmul.f32 %v1385, 0.03125
          %v1387 = vadd.f32 %v1386, 1e-05
          %v1388 = vrsqrt.pop %v1387
          %v1389 = vmul.f32 %v1388, %v1387
          %v1390 = vmul.f32 %v1389, %v1388
          %v1391 = vmul.f32 0.5, %v1390
          %v1392 = vsub.f32 1.5, %v1391
          %v1393 = vmul.f32 %v1388, %v1392
          %vm1394 = vweird.f32 %v1387
          %vm1395 = vweird.f32 %v1388
          %vm1396 = vmor %vm1394, %vm1395
          %v1397 = vsel %vm1396, %v1388, %v1393
          %v1398 = vmul.f32 %v1376, %v1397
          %v1400 = vperm.slane %v1382, 0
          %v1402 = vmul.f32 %v1398, %v1400
          %1403 = vst [vmem:[#allocation9] sm:$0xff] %v1402
        $region92: #{chatglm_forward.1} parent=71 // pred_fallthru
          _
        // Predicated region
        $region93: #{chatglm_forward.1} parent=71 // pred_check
          %p1404 = pneg %p350
        $region94: #{chatglm_forward.1} parent=71 // pred_check_branch
          %1406 = sbr.rel (%p1404) target = $region96
        $region95: #{chatglm_forward.1} parent=71 // pred_region
          %1408 = vsyncadd [#allocation5], 0
          %s1410 = sshll.u32 [#allocation9], 4
          %s1411 = int_to_ptr.vmem [resolvable:$true] %s1410
          %s1412 = sshll.u32 %s13, 4
          %s1413 = int_to_ptr.hbm [resolvable:$true] %s1412
          %1415 = dma.vmem_to_hbm [thread:$0]  %s1411, 128, %s1413, [#allocation5]
        $region96: #{chatglm_forward.1} parent=71 // pred_fallthru
          _
        // Predicated region
        $region97: #{chatglm_forward.1} parent=71 // pred_check
          %p1416 = pneg %p350
        $region98: #{chatglm_forward.1} parent=71 // pred_check_branch
          %1418 = sbr.rel (%p1416) target = $region100
        $region99: #{chatglm_forward.1} parent=71 // pred_region
          %1420 = dma.done [#allocation5], 128
        $region100: #{chatglm_forward.1} parent=71 // pred_fallthru
          _
      $region72: #{chatglm_forward.1} parent=5 // pred_fallthru
        _
      %p1421 = scmp.le.s32.totalorder 2, %s24
      // Predicated region
      $region101: #{chatglm_forward.1} parent=5 // pred_check
        %p1422 = pneg %p1421
      $region102: #{chatglm_forward.1} parent=5 // pred_check_branch
        %1424 = sbr.rel (%p1422) target = $region104
      $region103: #{chatglm_forward.1} parent=5 // pred_region
        %s1425 = ssub.s32 %s24, 2
      $region104: #{chatglm_forward.1} parent=5 // pred_fallthru
        _
    $region6: #{chatglm_forward.1} parent=1 // loop_footer
      %s28 = sadd.s32 1, %s24
    $region7: #{chatglm_forward.1} parent=1 // loop_footer_branch
      %23 = sbr.rel target = $region3
    $region8: #{chatglm_forward.1} parent=1 // loop_exit
      _
    %1426 = vsyncpa [#allocation4], 1
    %s1427 = scalar_lea.sflag [#allocation4], 1
    %1428 = vsyncpa %s1427, 1
    %1429 = vsyncpa [#allocation7], 1
    %s1430 = scalar_lea.sflag [#allocation7], 1
    %1431 = vsyncpa %s1430, 1
    %1432 = vsyncpa [#allocation5], 1
    %s1433 = scalar_lea.sflag [#allocation5], 1
    %1434 = vsyncpa %s1433, 1

</llo_original>
